<compile_context>
chip_gen: v7x
topology: tpu7x:2x2x1
jax: 0.10.0
libtpu: 0.0.40
codegen_flags: <defaults>
</compile_context>

<pallas_src>
import functools

import jax
import jax.numpy as jnp
from jax import lax
from jax.experimental import pallas as pl
from jax.experimental.pallas import tpu as pltpu

# Matches the module: [x] + [x[::2*i, ::2*i] for i in range(1, 4)] -> strides 1,2,4,6
_STRIDES = (1, 2, 4, 6)
_HALO = 16                      # >= 2 * max stride (=12); multiple of 8 and 16


def _cdiv(a, b):
    return -(-a // b)


def _round_up(x, m):
    return ((x + m - 1) // m) * m


def _shift_by(x, k, axis):
    """rolled[i] = x[(i + k) % n] along `axis` (np.roll with negative shift)."""
    n = x.shape[axis]
    shift = (-k) % n
    if shift == 0:
        return x
    return pltpu.roll(x, shift=shift, axis=axis)


def _grad_loss_block_kernel(pred_ref, gt_ref, pred_hal_ref, gt_hal_ref,
                            rsel_ref, csel_ref, out_ref, *,
                            valid_mask, max_depth, eps, strides,
                            h, w, block_rows, halo, max_halo_blk):
    i = pl.program_id(0)
    n_scales = len(strides)
    R = block_rows

    # ---- init the resident SMEM accumulator on the first row block ---------
    @pl.when(i == 0)
    def _init():
        for si in range(n_scales):
            for j in range(3):
                out_ref[si, j] = jnp.float32(0.0)

    # ---- global row / lane indices & garbage sanitization ------------------
    # The owned block and the halo block may overhang the true (h, w) extents
    # (ragged last block, lane padding to Wp, clamped halo).  Out-of-bounds
    # values are unspecified -> replace them with 1.0 so log() stays finite;
    # the selection tables (built from the true h, w) exclude them from every
    # sum, so the value never matters.
    wp = pred_ref.shape[1]
    own_rows = i * R + lax.broadcasted_iota(jnp.int32, (R, 1), 0)
    hal_start = jnp.minimum((i + 1) * R, max_halo_blk * halo)
    hal_rows = hal_start + lax.broadcasted_iota(jnp.int32, (halo, 1), 0)
    col_ok = lax.broadcasted_iota(jnp.int32, (1, wp), 1) < w
    own_ok = jnp.logical_and(own_rows < h, col_ok)
    hal_ok = jnp.logical_and(hal_rows < h, col_ok)

    def clean(ref, ok):
        return jnp.where(ok, ref[...].astype(jnp.float32), 1.0)

    p_ext = jnp.concatenate(
        [clean(pred_ref, own_ok), clean(pred_hal_ref, hal_ok)], axis=0)
    g_ext = jnp.concatenate(
        [clean(gt_ref, own_ok), clean(gt_hal_ref, hal_ok)], axis=0)

    # Fused logs: one EUP log + one divide instead of two logs.
    raw_ext = jnp.log((p_ext + eps) / (g_ext + eps))          # (R+halo, Wp)

    if valid_mask:
        mb = g_ext > 0
        if max_depth is not None:
            mb = jnp.logical_and(mb, g_ext <= max_depth)
        m_ext = mb.astype(jnp.float32)
        d_ext = raw_ext * m_ext
        m = m_ext[:R, :]
    else:
        m_ext = None
        d_ext = raw_ext
        m = None
    d = d_ext[:R, :]

    for si, s in enumerate(strides):
        k = 2 * s
        r_sel = rsel_ref[:, 2 * si:2 * si + 1]          # (R,1) rows of scale si
        r_sel_v = rsel_ref[:, 2 * si + 1:2 * si + 2]    # (R,1) rows w/ +2 partner
        c_pair = csel_ref[:, 2 * si:2 * si + 2]         # (Wp,2): [cols, cols w/ partner]

        # -- horizontal (lane-direction) pairs: no halo needed ----------------
        d_h = _shift_by(d, k, axis=1)
        if valid_mask:
            a_h = jnp.abs(d - d_h) * (m * _shift_by(m, k, axis=1))
        else:
            a_h = jnp.abs(d - d_h)
        # MXU: column selection + lane reduction in one contraction.
        t_h = jnp.dot(a_h, c_pair, preferred_element_type=jnp.float32)[:, 1:2]
        out_ref[si, 0] += jnp.sum(t_h * r_sel)

        # -- vertical (sublane-direction) pairs: partner may come from halo ---
        d_v = _shift_by(d_ext, k, axis=0)[:R, :]
        if valid_mask:
            a_v = jnp.abs(d - d_v) * (m * _shift_by(m_ext, k, axis=0)[:R, :])
        else:
            a_v = jnp.abs(d - d_v)
        t_v = jnp.dot(a_v, c_pair, preferred_element_type=jnp.float32)[:, 0:1]
        out_ref[si, 1] += jnp.sum(t_v * r_sel_v)

        # -- valid-pixel count of this scale (only data dependent if masked) --
        if valid_mask:
            t_n = jnp.dot(m, c_pair, preferred_element_type=jnp.float32)[:, 0:1]
            out_ref[si, 2] += jnp.sum(t_n * r_sel)


def _row_selectors(h, h_grid, strides):
    """Per-scale row selectors built from the TRUE h (rows >= h excluded)."""
    r = jnp.arange(h_grid)
    cols = []
    for s in strides:
        on = (r % s == 0) & (r < h)           # rows of the [::s] downsampled map
        cols.append(on)
        cols.append(on & (r + 2 * s < h))     # rows that have a +2-step partner
    return jnp.stack(cols, axis=1).astype(jnp.float32)      # (h_grid, 2*len)


def _col_selectors(w, w_pad, strides):
    """Per-scale column selectors built from the TRUE w (lanes >= w excluded)."""
    c = jnp.arange(w_pad)
    cols = []
    for s in strides:
        on = (c % s == 0) & (c < w)
        cols.append(on)
        cols.append(on & (c + 2 * s < w))
    return jnp.stack(cols, axis=1).astype(jnp.float32)      # (w_pad, 2*len)


def _vmem_limit_bytes():
    # ~75% of physical VMEM per TensorCore (v5e/v6e: 128 MiB, v7x: 64 MiB).
    try:
        cap = int(pltpu.get_tpu_info().vmem_capacity_bytes)
    except Exception:
        cap = 64 * 1024 * 1024
    return max(32 * 1024 * 1024, min(cap * 3 // 4, 96 * 1024 * 1024))


def _pick_block_rows(h, w_pad, vmem_limit):
    # Peak ~12 (R, Wp) f32 arrays live (double-buffered inputs + temporaries).
    budget = int(vmem_limit * 0.55)
    r = budget // (12 * 4 * max(w_pad, 1))
    r = min(r, 1024, _round_up(h, 16))
    r = (r // 16) * 16
    return max(r, 16)


def gradient_loss(depth_pred, depth_gt, *, valid_mask=True, loss_weight=1.0,
                  max_depth=None, eps=1e-3, block_rows=None):
    """JAX/Pallas port of GradientLoss.forward (2-D depth maps)."""
    h, w = depth_pred.shape
    n_scales = len(_STRIDES)
    wp = _round_up(w, 128)                 # lane extent of the VMEM blocks
    vmem_limit = _vmem_limit_bytes()
    if block_rows is None:
        block_rows = _pick_block_rows(h, wp, vmem_limit)
    if block_rows % _HALO != 0 or block_rows < _HALO:
        raise ValueError("block_rows must be a positive multiple of 16")
    R = block_rows
    nb = _cdiv(h, R)
    max_halo_blk = max(_cdiv(h, _HALO) - 1, 0)

    # Tiny per-scale stride-selection tables (0/1) used as MXU contraction
    # operands; csel stays resident, rsel streams one (R, 8) block per step.
    # (Kept as inputs rather than in-kernel iota because the stride-6 pattern
    # needs an integer modulo that is cheap here and portability-risky as a
    # vectorized in-kernel op; the bound/halo predicates ARE in-kernel iota.)
    rsel = _row_selectors(h, nb * R, _STRIDES)        # (nb*R, 2*n_scales)
    csel = _col_selectors(w, wp, _STRIDES)            # (wp,   2*n_scales)

    kernel = functools.partial(
        _grad_loss_block_kernel,
        valid_mask=valid_mask, max_depth=max_depth, eps=eps, strides=_STRIDES,
        h=h, w=w, block_rows=R, halo=_HALO, max_halo_blk=max_halo_blk)

    halo_map = lambda i: (jnp.minimum((i + 1) * (R // _HALO), max_halo_blk), 0)

    sums = pl.pallas_call(
        kernel,
        out_shape=jax.ShapeDtypeStruct((n_scales, 3), jnp.float32),
        grid=(nb,),
        in_specs=[
            pl.BlockSpec((R, wp), lambda i: (i, 0)),             # pred, owned rows
            pl.BlockSpec((R, wp), lambda i: (i, 0)),             # gt,   owned rows
            pl.BlockSpec((_HALO, wp), halo_map),                 # pred, halo rows
            pl.BlockSpec((_HALO, wp), halo_map),                 # gt,   halo rows
            pl.BlockSpec((R, 2 * n_scales), lambda i: (i, 0)),   # row selectors
            pl.BlockSpec((wp, 2 * n_scales), lambda i: (0, 0)),  # col selectors
        ],
        out_specs=pl.BlockSpec(memory_space=pltpu.MemorySpace.SMEM),
        compiler_params=pltpu.CompilerParams(
            dimension_semantics=("arbitrary",),
            vmem_limit_bytes=vmem_limit),
    )(depth_pred, depth_gt, depth_pred, depth_gt, rsel, csel)

    loss = jnp.float32(0.0)
    for si, s in enumerate(_STRIDES):
        if valid_mask:
            n = sums[si, 2]
        else:
            n = jnp.float32(_cdiv(h, s) * _cdiv(w, s))    # numel of scale si
        loss = loss + (sums[si, 0] + sums[si, 1]) / n
    return loss_weight * loss


def gradient_loss_ref(depth_pred, depth_gt, *, valid_mask=True, loss_weight=1.0,
                      max_depth=None, eps=1e-3):
    """Pure-JAX reference mirroring the PyTorch module."""
    preds = [depth_pred] + [depth_pred[:: 2 * i, :: 2 * i] for i in range(1, 4)]
    gts = [depth_gt] + [depth_gt[:: 2 * i, :: 2 * i] for i in range(1, 4)]
    loss = jnp.float32(0.0)
    for p, g in zip(preds, gts):
        if valid_mask:
            mask = g > 0
            if max_depth is not None:
                mask = jnp.logical_and(g > 0, g <= max_depth)
            mask = mask.astype(jnp.float32)
            n = jnp.sum(mask)
        else:
            mask = jnp.ones_like(g)
            n = jnp.float32(p.size)
        d = (jnp.log(p + eps) - jnp.log(g + eps)) * mask
        v = jnp.abs(d[:-2, :] - d[2:, :]) * (mask[:-2, :] * mask[2:, :])
        hgr = jnp.abs(d[:, :-2] - d[:, 2:]) * (mask[:, :-2] * mask[:, 2:])
        loss = loss + (jnp.sum(hgr) + jnp.sum(v)) / n
    return loss_weight * loss


if __name__ == "__main__":
    key = jax.random.PRNGKey(0)
    k1, k2 = jax.random.split(key)
    H, W = 32, 128

    depth_pred = jax.random.uniform(k1, (H, W), jnp.float32, minval=0.1, maxval=5.0)
    depth_gt = jax.random.uniform(k2, (H, W), jnp.float32, minval=0.0, maxval=5.0)
    # Zero out some gt pixels so the valid mask actually does something.
    depth_gt = jnp.where(depth_gt < 0.5, 0.0, depth_gt)

    # Default config (valid_mask=True).
    out = jax.block_until_ready(gradient_loss(depth_pred, depth_gt))
    ref = gradient_loss_ref(depth_pred, depth_gt)
    assert jnp.isfinite(out), out
    assert jnp.allclose(out, ref, rtol=1e-4, atol=1e-4), (out, ref)

    # max_depth filtering.
    out_md = jax.block_until_ready(gradient_loss(depth_pred, depth_gt, max_depth=4.0))
    ref_md = gradient_loss_ref(depth_pred, depth_gt, max_depth=4.0)
    assert jnp.allclose(out_md, ref_md, rtol=1e-4, atol=1e-4), (out_md, ref_md)

    # valid_mask=False (specialized no-mask path).
    out_nm = jax.block_until_ready(gradient_loss(depth_pred, depth_gt, valid_mask=False))
    ref_nm = gradient_loss_ref(depth_pred, depth_gt, valid_mask=False)
    assert jnp.allclose(out_nm, ref_nm, rtol=1e-4, atol=1e-4), (out_nm, ref_nm)

    # Non-(8,128)-aligned shape exercises the ragged row/lane handling
    # (no HBM padding anywhere).
    dp2, dg2 = depth_pred[:30, :100], depth_gt[:30, :100]
    out_pad = jax.block_until_ready(gradient_loss(dp2, dg2))
    ref_pad = gradient_loss_ref(dp2, dg2)
    assert jnp.allclose(out_pad, ref_pad, rtol=1e-4, atol=1e-4), (out_pad, ref_pad)

    # Multi-row-block path: force small blocks so the grid has several steps
    # (exercises the halo fetch, cross-block accumulation, clamped halo and
    # the ragged last block).
    k3, k4 = jax.random.split(k2)
    H2, W2 = 200, 160
    dp3 = jax.random.uniform(k3, (H2, W2), jnp.float32, minval=0.1, maxval=5.0)
    dg3 = jax.random.uniform(k4, (H2, W2), jnp.float32, minval=0.0, maxval=5.0)
    dg3 = jnp.where(dg3 < 0.3, 0.0, dg3)
    out_mb = jax.block_until_ready(gradient_loss(dp3, dg3, block_rows=48))
    ref_mb = gradient_loss_ref(dp3, dg3)
    assert jnp.allclose(out_mb, ref_mb, rtol=1e-4, atol=1e-4), (out_mb, ref_mb)

    print("KERNEL_OK")
</pallas_src>

<mosaic_0001>
module attributes {stable_mosaic.version = 11 : i64} {
  func.func @_grad_loss_block_kernel(%arg0: i32, %arg1: memref<32x128xf32, #tpu.memory_space<vmem>>, %arg2: memref<32x128xf32, #tpu.memory_space<vmem>>, %arg3: memref<16x128xf32, #tpu.memory_space<vmem>>, %arg4: memref<16x128xf32, #tpu.memory_space<vmem>>, %arg5: memref<32x8xf32, #tpu.memory_space<vmem>>, %arg6: memref<128x8xf32, #tpu.memory_space<vmem>>, %arg7: memref<4x3xf32, #tpu.memory_space<smem>>) attributes {dimension_semantics = [#tpu.dimension_semantics<arbitrary>], iteration_bounds = array<i64: 1>, scalar_prefetch = 0 : i64, scratch_operands = 0 : i64, tpu.core_type = #tpu.core_type<tc>, window_params = [{transform_indices = @transform_0, window_bounds = array<i64: 32, 128>}, {transform_indices = @transform_1, window_bounds = array<i64: 32, 128>}, {transform_indices = @transform_2, window_bounds = array<i64: 16, 128>}, {transform_indices = @transform_3, window_bounds = array<i64: 16, 128>}, {transform_indices = @transform_4, window_bounds = array<i64: 32, 8>}, {pipeline_mode = #tpu.pipeline_mode<synchronous>, transform_indices = @transform_5, window_bounds = array<i64: 128, 8>}, {transform_indices = @transform_6, window_bounds = array<i64: 4, 3>}]} {
    %c0_i32 = arith.constant 0 : i32
    %0 = arith.cmpi eq, %arg0, %c0_i32 : i32
    %1 = arith.extui %0 : i1 to i32
    %c0_i32_0 = arith.constant 0 : i32
    %2 = arith.cmpi ne, %1, %c0_i32_0 : i32
    scf.if %2 {
      %cst_114 = arith.constant 0.000000e+00 : f32
      %c0_115 = arith.constant 0 : index
      %c0_116 = arith.constant 0 : index
      %241 = memref.load %arg7[%c0_115, %c0_116] : memref<4x3xf32, #tpu.memory_space<smem>>
      memref.store %cst_114, %arg7[%c0_115, %c0_116] : memref<4x3xf32, #tpu.memory_space<smem>>
      %cst_117 = arith.constant 0.000000e+00 : f32
      %c0_118 = arith.constant 0 : index
      %c1_119 = arith.constant 1 : index
      %242 = memref.load %arg7[%c0_118, %c1_119] : memref<4x3xf32, #tpu.memory_space<smem>>
      memref.store %cst_117, %arg7[%c0_118, %c1_119] : memref<4x3xf32, #tpu.memory_space<smem>>
      %cst_120 = arith.constant 0.000000e+00 : f32
      %c0_121 = arith.constant 0 : index
      %c2_122 = arith.constant 2 : index
      %243 = memref.load %arg7[%c0_121, %c2_122] : memref<4x3xf32, #tpu.memory_space<smem>>
      memref.store %cst_120, %arg7[%c0_121, %c2_122] : memref<4x3xf32, #tpu.memory_space<smem>>
      %cst_123 = arith.constant 0.000000e+00 : f32
      %c1_124 = arith.constant 1 : index
      %c0_125 = arith.constant 0 : index
      %244 = memref.load %arg7[%c1_124, %c0_125] : memref<4x3xf32, #tpu.memory_space<smem>>
      memref.store %cst_123, %arg7[%c1_124, %c0_125] : memref<4x3xf32, #tpu.memory_space<smem>>
      %cst_126 = arith.constant 0.000000e+00 : f32
      %c1_127 = arith.constant 1 : index
      %c1_128 = arith.constant 1 : index
      %245 = memref.load %arg7[%c1_127, %c1_128] : memref<4x3xf32, #tpu.memory_space<smem>>
      memref.store %cst_126, %arg7[%c1_127, %c1_128] : memref<4x3xf32, #tpu.memory_space<smem>>
      %cst_129 = arith.constant 0.000000e+00 : f32
      %c1_130 = arith.constant 1 : index
      %c2_131 = arith.constant 2 : index
      %246 = memref.load %arg7[%c1_130, %c2_131] : memref<4x3xf32, #tpu.memory_space<smem>>
      memref.store %cst_129, %arg7[%c1_130, %c2_131] : memref<4x3xf32, #tpu.memory_space<smem>>
      %cst_132 = arith.constant 0.000000e+00 : f32
      %c2_133 = arith.constant 2 : index
      %c0_134 = arith.constant 0 : index
      %247 = memref.load %arg7[%c2_133, %c0_134] : memref<4x3xf32, #tpu.memory_space<smem>>
      memref.store %cst_132, %arg7[%c2_133, %c0_134] : memref<4x3xf32, #tpu.memory_space<smem>>
      %cst_135 = arith.constant 0.000000e+00 : f32
      %c2_136 = arith.constant 2 : index
      %c1_137 = arith.constant 1 : index
      %248 = memref.load %arg7[%c2_136, %c1_137] : memref<4x3xf32, #tpu.memory_space<smem>>
      memref.store %cst_135, %arg7[%c2_136, %c1_137] : memref<4x3xf32, #tpu.memory_space<smem>>
      %cst_138 = arith.constant 0.000000e+00 : f32
      %c2_139 = arith.constant 2 : index
      %c2_140 = arith.constant 2 : index
      %249 = memref.load %arg7[%c2_139, %c2_140] : memref<4x3xf32, #tpu.memory_space<smem>>
      memref.store %cst_138, %arg7[%c2_139, %c2_140] : memref<4x3xf32, #tpu.memory_space<smem>>
      %cst_141 = arith.constant 0.000000e+00 : f32
      %c3_142 = arith.constant 3 : index
      %c0_143 = arith.constant 0 : index
      %250 = memref.load %arg7[%c3_142, %c0_143] : memref<4x3xf32, #tpu.memory_space<smem>>
      memref.store %cst_141, %arg7[%c3_142, %c0_143] : memref<4x3xf32, #tpu.memory_space<smem>>
      %cst_144 = arith.constant 0.000000e+00 : f32
      %c3_145 = arith.constant 3 : index
      %c1_146 = arith.constant 1 : index
      %251 = memref.load %arg7[%c3_145, %c1_146] : memref<4x3xf32, #tpu.memory_space<smem>>
      memref.store %cst_144, %arg7[%c3_145, %c1_146] : memref<4x3xf32, #tpu.memory_space<smem>>
      %cst_147 = arith.constant 0.000000e+00 : f32
      %c3_148 = arith.constant 3 : index
      %c2_149 = arith.constant 2 : index
      %252 = memref.load %arg7[%c3_148, %c2_149] : memref<4x3xf32, #tpu.memory_space<smem>>
      memref.store %cst_147, %arg7[%c3_148, %c2_149] : memref<4x3xf32, #tpu.memory_space<smem>>
    } else {
    }
    %c32_i32 = arith.constant 32 : i32
    %3 = arith.muli %arg0, %c32_i32 : i32
    %4 = tpu.iota {dimensions = array<i32: 0>} : vector<32x1xi32>
    %5 = vector.broadcast %3 : i32 to vector<32x1xi32>
    %6 = arith.addi %5, %4 : vector<32x1xi32>
    %c1_i32 = arith.constant 1 : i32
    %7 = arith.addi %arg0, %c1_i32 : i32
    %c32_i32_1 = arith.constant 32 : i32
    %8 = arith.muli %7, %c32_i32_1 : i32
    %c16_i32 = arith.constant 16 : i32
    %9 = arith.minsi %8, %c16_i32 : i32
    %10 = tpu.iota {dimensions = array<i32: 0>} : vector<16x1xi32>
    %11 = vector.broadcast %9 : i32 to vector<16x1xi32>
    %12 = arith.addi %11, %10 : vector<16x1xi32>
    %13 = tpu.iota {dimensions = array<i32: 1>} : vector<1x128xi32>
    %c128_i32 = arith.constant 128 : i32
    %14 = vector.broadcast %c128_i32 : i32 to vector<1x128xi32>
    %15 = arith.cmpi slt, %13, %14 : vector<1x128xi32>
    %c32_i32_2 = arith.constant 32 : i32
    %16 = vector.broadcast %c32_i32_2 : i32 to vector<32x1xi32>
    %17 = arith.cmpi slt, %6, %16 : vector<32x1xi32>
    %18 = vector.broadcast %17 : vector<32x1xi1> to vector<32x128xi1>
    %19 = vector.broadcast %15 : vector<1x128xi1> to vector<32x128xi1>
    %20 = arith.andi %18, %19 : vector<32x128xi1>
    %c32_i32_3 = arith.constant 32 : i32
    %21 = vector.broadcast %c32_i32_3 : i32 to vector<16x1xi32>
    %22 = arith.cmpi slt, %12, %21 : vector<16x1xi32>
    %23 = vector.broadcast %22 : vector<16x1xi1> to vector<16x128xi1>
    %24 = vector.broadcast %15 : vector<1x128xi1> to vector<16x128xi1>
    %25 = arith.andi %23, %24 : vector<16x128xi1>
    %c0 = arith.constant 0 : index
    %c0_4 = arith.constant 0 : index
    %26 = vector.load %arg1[%c0, %c0_4] : memref<32x128xf32, #tpu.memory_space<vmem>>, vector<32x128xf32>
    %cst = arith.constant 1.000000e+00 : f32
    %27 = vector.broadcast %cst : f32 to vector<32x128xf32>
    %28 = arith.select %20, %26, %27 : vector<32x128xi1>, vector<32x128xf32>
    %c0_5 = arith.constant 0 : index
    %c0_6 = arith.constant 0 : index
    %29 = vector.load %arg3[%c0_5, %c0_6] : memref<16x128xf32, #tpu.memory_space<vmem>>, vector<16x128xf32>
    %cst_7 = arith.constant 1.000000e+00 : f32
    %30 = vector.broadcast %cst_7 : f32 to vector<16x128xf32>
    %31 = arith.select %25, %29, %30 : vector<16x128xi1>, vector<16x128xf32>
    %32 = tpu.concatenate %28, %31 in 0 : vector<32x128xf32>, vector<16x128xf32> -> vector<48x128xf32>
    %c0_8 = arith.constant 0 : index
    %c0_9 = arith.constant 0 : index
    %33 = vector.load %arg2[%c0_8, %c0_9] : memref<32x128xf32, #tpu.memory_space<vmem>>, vector<32x128xf32>
    %cst_10 = arith.constant 1.000000e+00 : f32
    %34 = vector.broadcast %cst_10 : f32 to vector<32x128xf32>
    %35 = arith.select %20, %33, %34 : vector<32x128xi1>, vector<32x128xf32>
    %c0_11 = arith.constant 0 : index
    %c0_12 = arith.constant 0 : index
    %36 = vector.load %arg4[%c0_11, %c0_12] : memref<16x128xf32, #tpu.memory_space<vmem>>, vector<16x128xf32>
    %cst_13 = arith.constant 1.000000e+00 : f32
    %37 = vector.broadcast %cst_13 : f32 to vector<16x128xf32>
    %38 = arith.select %25, %36, %37 : vector<16x128xi1>, vector<16x128xf32>
    %39 = tpu.concatenate %35, %38 in 0 : vector<32x128xf32>, vector<16x128xf32> -> vector<48x128xf32>
    %cst_14 = arith.constant 1.000000e-03 : f32
    %40 = vector.broadcast %cst_14 : f32 to vector<48x128xf32>
    %41 = arith.addf %32, %40 : vector<48x128xf32>
    %cst_15 = arith.constant 1.000000e-03 : f32
    %42 = vector.broadcast %cst_15 : f32 to vector<48x128xf32>
    %43 = arith.addf %39, %42 : vector<48x128xf32>
    %44 = arith.divf %41, %43 : vector<48x128xf32>
    %45 = math.log %44 : vector<48x128xf32>
    %cst_16 = arith.constant 0.000000e+00 : f32
    %46 = vector.broadcast %cst_16 : f32 to vector<48x128xf32>
    %47 = arith.cmpf ogt, %39, %46 : vector<48x128xf32>
    %48 = arith.extui %47 : vector<48x128xi1> to vector<48x128xi32>
    %49 = arith.sitofp %48 : vector<48x128xi32> to vector<48x128xf32>
    %50 = arith.mulf %45, %49 : vector<48x128xf32>
    %51 = vector.extract_strided_slice %49 {offsets = [0, 0], sizes = [32, 128], strides = [1, 1]} : vector<48x128xf32> to vector<32x128xf32>
    %52 = vector.extract_strided_slice %50 {offsets = [0, 0], sizes = [32, 128], strides = [1, 1]} : vector<48x128xf32> to vector<32x128xf32>
    %c0_17 = arith.constant 0 : index
    %c0_18 = arith.constant 0 : index
    %53 = vector.load %arg5[%c0_17, %c0_18] : memref<32x8xf32, #tpu.memory_space<vmem>>, vector<32x1xf32>
    %c0_19 = arith.constant 0 : index
    %c1 = arith.constant 1 : index
    %54 = vector.load %arg5[%c0_19, %c1] : memref<32x8xf32, #tpu.memory_space<vmem>>, vector<32x1xf32>
    %c0_20 = arith.constant 0 : index
    %c0_21 = arith.constant 0 : index
    %55 = vector.load %arg6[%c0_20, %c0_21] : memref<128x8xf32, #tpu.memory_space<vmem>>, vector<128x2xf32>
    %c126_i32 = arith.constant 126 : i32
    %56 = tpu.dynamic_rotate %52 by %c126_i32 dim 1 : vector<32x128xf32>, i32 -> vector<32x128xf32>
    %57 = arith.subf %52, %56 : vector<32x128xf32>
    %58 = math.absf %57 : vector<32x128xf32>
    %c126_i32_22 = arith.constant 126 : i32
    %59 = tpu.dynamic_rotate %51 by %c126_i32_22 dim 1 : vector<32x128xf32>, i32 -> vector<32x128xf32>
    %60 = arith.mulf %51, %59 : vector<32x128xf32>
    %61 = arith.mulf %58, %60 : vector<32x128xf32>
    %cst_23 = arith.constant dense<0.000000e+00> : vector<32x2xf32>
    %62 = tpu.matmul %61, %55, %cst_23 {dimension_numbers = #tpu.dot_dimension_numbers<[1], [0], [0], [1], [0, 0, 1, 1], [], []>} : vector<32x128xf32>, vector<128x2xf32>, vector<32x2xf32> -> vector<32x2xf32>
    %63 = vector.extract_strided_slice %62 {offsets = [0, 1], sizes = [32, 1], strides = [1, 1]} : vector<32x2xf32> to vector<32x1xf32>
    %c0_24 = arith.constant 0 : index
    %c0_25 = arith.constant 0 : index
    %64 = memref.load %arg7[%c0_24, %c0_25] : memref<4x3xf32, #tpu.memory_space<smem>>
    %65 = arith.mulf %63, %53 : vector<32x1xf32>
    %66 = vector.shape_cast %65 : vector<32x1xf32> to vector<1x32x1xf32>
    %cst_26 = arith.constant dense<0.000000e+00> : vector<1xf32>
    %67 = vector.multi_reduction <add>, %66, %cst_26 [1, 2] : vector<1x32x1xf32> to vector<1xf32>
    %68 = vector.shape_cast %67 : vector<1xf32> to vector<1x1x1xf32>
    %69 = vector.extract %68[0, 0, 0] : f32 from vector<1x1x1xf32>
    %70 = arith.addf %64, %69 : f32
    %c0_27 = arith.constant 0 : index
    %c0_28 = arith.constant 0 : index
    %71 = memref.load %arg7[%c0_27, %c0_28] : memref<4x3xf32, #tpu.memory_space<smem>>
    memref.store %70, %arg7[%c0_27, %c0_28] : memref<4x3xf32, #tpu.memory_space<smem>>
    %c46_i32 = arith.constant 46 : i32
    %72 = tpu.dynamic_rotate %50 by %c46_i32 dim 0 : vector<48x128xf32>, i32 -> vector<48x128xf32>
    %73 = vector.extract_strided_slice %72 {offsets = [0, 0], sizes = [32, 128], strides = [1, 1]} : vector<48x128xf32> to vector<32x128xf32>
    %74 = arith.subf %52, %73 : vector<32x128xf32>
    %75 = math.absf %74 : vector<32x128xf32>
    %c46_i32_29 = arith.constant 46 : i32
    %76 = tpu.dynamic_rotate %49 by %c46_i32_29 dim 0 : vector<48x128xf32>, i32 -> vector<48x128xf32>
    %77 = vector.extract_strided_slice %76 {offsets = [0, 0], sizes = [32, 128], strides = [1, 1]} : vector<48x128xf32> to vector<32x128xf32>
    %78 = arith.mulf %51, %77 : vector<32x128xf32>
    %79 = arith.mulf %75, %78 : vector<32x128xf32>
    %cst_30 = arith.constant dense<0.000000e+00> : vector<32x2xf32>
    %80 = tpu.matmul %79, %55, %cst_30 {dimension_numbers = #tpu.dot_dimension_numbers<[1], [0], [0], [1], [0, 0, 1, 1], [], []>} : vector<32x128xf32>, vector<128x2xf32>, vector<32x2xf32> -> vector<32x2xf32>
    %81 = vector.extract_strided_slice %80 {offsets = [0, 0], sizes = [32, 1], strides = [1, 1]} : vector<32x2xf32> to vector<32x1xf32>
    %c0_31 = arith.constant 0 : index
    %c1_32 = arith.constant 1 : index
    %82 = memref.load %arg7[%c0_31, %c1_32] : memref<4x3xf32, #tpu.memory_space<smem>>
    %83 = arith.mulf %81, %54 : vector<32x1xf32>
    %84 = vector.shape_cast %83 : vector<32x1xf32> to vector<1x32x1xf32>
    %cst_33 = arith.constant dense<0.000000e+00> : vector<1xf32>
    %85 = vector.multi_reduction <add>, %84, %cst_33 [1, 2] : vector<1x32x1xf32> to vector<1xf32>
    %86 = vector.shape_cast %85 : vector<1xf32> to vector<1x1x1xf32>
    %87 = vector.extract %86[0, 0, 0] : f32 from vector<1x1x1xf32>
    %88 = arith.addf %82, %87 : f32
    %c0_34 = arith.constant 0 : index
    %c1_35 = arith.constant 1 : index
    %89 = memref.load %arg7[%c0_34, %c1_35] : memref<4x3xf32, #tpu.memory_space<smem>>
    memref.store %88, %arg7[%c0_34, %c1_35] : memref<4x3xf32, #tpu.memory_space<smem>>
    %cst_36 = arith.constant dense<0.000000e+00> : vector<32x2xf32>
    %90 = tpu.matmul %51, %55, %cst_36 {dimension_numbers = #tpu.dot_dimension_numbers<[1], [0], [0], [1], [0, 0, 1, 1], [], []>} : vector<32x128xf32>, vector<128x2xf32>, vector<32x2xf32> -> vector<32x2xf32>
    %91 = vector.extract_strided_slice %90 {offsets = [0, 0], sizes = [32, 1], strides = [1, 1]} : vector<32x2xf32> to vector<32x1xf32>
    %c0_37 = arith.constant 0 : index
    %c2 = arith.constant 2 : index
    %92 = memref.load %arg7[%c0_37, %c2] : memref<4x3xf32, #tpu.memory_space<smem>>
    %93 = arith.mulf %91, %53 : vector<32x1xf32>
    %94 = vector.shape_cast %93 : vector<32x1xf32> to vector<1x32x1xf32>
    %cst_38 = arith.constant dense<0.000000e+00> : vector<1xf32>
    %95 = vector.multi_reduction <add>, %94, %cst_38 [1, 2] : vector<1x32x1xf32> to vector<1xf32>
    %96 = vector.shape_cast %95 : vector<1xf32> to vector<1x1x1xf32>
    %97 = vector.extract %96[0, 0, 0] : f32 from vector<1x1x1xf32>
    %98 = arith.addf %92, %97 : f32
    %c0_39 = arith.constant 0 : index
    %c2_40 = arith.constant 2 : index
    %99 = memref.load %arg7[%c0_39, %c2_40] : memref<4x3xf32, #tpu.memory_space<smem>>
    memref.store %98, %arg7[%c0_39, %c2_40] : memref<4x3xf32, #tpu.memory_space<smem>>
    %c0_41 = arith.constant 0 : index
    %c2_42 = arith.constant 2 : index
    %100 = vector.load %arg5[%c0_41, %c2_42] : memref<32x8xf32, #tpu.memory_space<vmem>>, vector<32x1xf32>
    %c0_43 = arith.constant 0 : index
    %c3 = arith.constant 3 : index
    %101 = vector.load %arg5[%c0_43, %c3] : memref<32x8xf32, #tpu.memory_space<vmem>>, vector<32x1xf32>
    %c0_44 = arith.constant 0 : index
    %c2_45 = arith.constant 2 : index
    %102 = vector.load %arg6[%c0_44, %c2_45] : memref<128x8xf32, #tpu.memory_space<vmem>>, vector<128x2xf32>
    %c124_i32 = arith.constant 124 : i32
    %103 = tpu.dynamic_rotate %52 by %c124_i32 dim 1 : vector<32x128xf32>, i32 -> vector<32x128xf32>
    %104 = arith.subf %52, %103 : vector<32x128xf32>
    %105 = math.absf %104 : vector<32x128xf32>
    %c124_i32_46 = arith.constant 124 : i32
    %106 = tpu.dynamic_rotate %51 by %c124_i32_46 dim 1 : vector<32x128xf32>, i32 -> vector<32x128xf32>
    %107 = arith.mulf %51, %106 : vector<32x128xf32>
    %108 = arith.mulf %105, %107 : vector<32x128xf32>
    %cst_47 = arith.constant dense<0.000000e+00> : vector<32x2xf32>
    %109 = tpu.matmul %108, %102, %cst_47 {dimension_numbers = #tpu.dot_dimension_numbers<[1], [0], [0], [1], [0, 0, 1, 1], [], []>} : vector<32x128xf32>, vector<128x2xf32>, vector<32x2xf32> -> vector<32x2xf32>
    %110 = vector.extract_strided_slice %109 {offsets = [0, 1], sizes = [32, 1], strides = [1, 1]} : vector<32x2xf32> to vector<32x1xf32>
    %c1_48 = arith.constant 1 : index
    %c0_49 = arith.constant 0 : index
    %111 = memref.load %arg7[%c1_48, %c0_49] : memref<4x3xf32, #tpu.memory_space<smem>>
    %112 = arith.mulf %110, %100 : vector<32x1xf32>
    %113 = vector.shape_cast %112 : vector<32x1xf32> to vector<1x32x1xf32>
    %cst_50 = arith.constant dense<0.000000e+00> : vector<1xf32>
    %114 = vector.multi_reduction <add>, %113, %cst_50 [1, 2] : vector<1x32x1xf32> to vector<1xf32>
    %115 = vector.shape_cast %114 : vector<1xf32> to vector<1x1x1xf32>
    %116 = vector.extract %115[0, 0, 0] : f32 from vector<1x1x1xf32>
    %117 = arith.addf %111, %116 : f32
    %c1_51 = arith.constant 1 : index
    %c0_52 = arith.constant 0 : index
    %118 = memref.load %arg7[%c1_51, %c0_52] : memref<4x3xf32, #tpu.memory_space<smem>>
    memref.store %117, %arg7[%c1_51, %c0_52] : memref<4x3xf32, #tpu.memory_space<smem>>
    %c44_i32 = arith.constant 44 : i32
    %119 = tpu.dynamic_rotate %50 by %c44_i32 dim 0 : vector<48x128xf32>, i32 -> vector<48x128xf32>
    %120 = vector.extract_strided_slice %119 {offsets = [0, 0], sizes = [32, 128], strides = [1, 1]} : vector<48x128xf32> to vector<32x128xf32>
    %121 = arith.subf %52, %120 : vector<32x128xf32>
    %122 = math.absf %121 : vector<32x128xf32>
    %c44_i32_53 = arith.constant 44 : i32
    %123 = tpu.dynamic_rotate %49 by %c44_i32_53 dim 0 : vector<48x128xf32>, i32 -> vector<48x128xf32>
    %124 = vector.extract_strided_slice %123 {offsets = [0, 0], sizes = [32, 128], strides = [1, 1]} : vector<48x128xf32> to vector<32x128xf32>
    %125 = arith.mulf %51, %124 : vector<32x128xf32>
    %126 = arith.mulf %122, %125 : vector<32x128xf32>
    %cst_54 = arith.constant dense<0.000000e+00> : vector<32x2xf32>
    %127 = tpu.matmul %126, %102, %cst_54 {dimension_numbers = #tpu.dot_dimension_numbers<[1], [0], [0], [1], [0, 0, 1, 1], [], []>} : vector<32x128xf32>, vector<128x2xf32>, vector<32x2xf32> -> vector<32x2xf32>
    %128 = vector.extract_strided_slice %127 {offsets = [0, 0], sizes = [32, 1], strides = [1, 1]} : vector<32x2xf32> to vector<32x1xf32>
    %c1_55 = arith.constant 1 : index
    %c1_56 = arith.constant 1 : index
    %129 = memref.load %arg7[%c1_55, %c1_56] : memref<4x3xf32, #tpu.memory_space<smem>>
    %130 = arith.mulf %128, %101 : vector<32x1xf32>
    %131 = vector.shape_cast %130 : vector<32x1xf32> to vector<1x32x1xf32>
    %cst_57 = arith.constant dense<0.000000e+00> : vector<1xf32>
    %132 = vector.multi_reduction <add>, %131, %cst_57 [1, 2] : vector<1x32x1xf32> to vector<1xf32>
    %133 = vector.shape_cast %132 : vector<1xf32> to vector<1x1x1xf32>
    %134 = vector.extract %133[0, 0, 0] : f32 from vector<1x1x1xf32>
    %135 = arith.addf %129, %134 : f32
    %c1_58 = arith.constant 1 : index
    %c1_59 = arith.constant 1 : index
    %136 = memref.load %arg7[%c1_58, %c1_59] : memref<4x3xf32, #tpu.memory_space<smem>>
    memref.store %135, %arg7[%c1_58, %c1_59] : memref<4x3xf32, #tpu.memory_space<smem>>
    %cst_60 = arith.constant dense<0.000000e+00> : vector<32x2xf32>
    %137 = tpu.matmul %51, %102, %cst_60 {dimension_numbers = #tpu.dot_dimension_numbers<[1], [0], [0], [1], [0, 0, 1, 1], [], []>} : vector<32x128xf32>, vector<128x2xf32>, vector<32x2xf32> -> vector<32x2xf32>
    %138 = vector.extract_strided_slice %137 {offsets = [0, 0], sizes = [32, 1], strides = [1, 1]} : vector<32x2xf32> to vector<32x1xf32>
    %c1_61 = arith.constant 1 : index
    %c2_62 = arith.constant 2 : index
    %139 = memref.load %arg7[%c1_61, %c2_62] : memref<4x3xf32, #tpu.memory_space<smem>>
    %140 = arith.mulf %138, %100 : vector<32x1xf32>
    %141 = vector.shape_cast %140 : vector<32x1xf32> to vector<1x32x1xf32>
    %cst_63 = arith.constant dense<0.000000e+00> : vector<1xf32>
    %142 = vector.multi_reduction <add>, %141, %cst_63 [1, 2] : vector<1x32x1xf32> to vector<1xf32>
    %143 = vector.shape_cast %142 : vector<1xf32> to vector<1x1x1xf32>
    %144 = vector.extract %143[0, 0, 0] : f32 from vector<1x1x1xf32>
    %145 = arith.addf %139, %144 : f32
    %c1_64 = arith.constant 1 : index
    %c2_65 = arith.constant 2 : index
    %146 = memref.load %arg7[%c1_64, %c2_65] : memref<4x3xf32, #tpu.memory_space<smem>>
    memref.store %145, %arg7[%c1_64, %c2_65] : memref<4x3xf32, #tpu.memory_space<smem>>
    %c0_66 = arith.constant 0 : index
    %c4 = arith.constant 4 : index
    %147 = vector.load %arg5[%c0_66, %c4] : memref<32x8xf32, #tpu.memory_space<vmem>>, vector<32x1xf32>
    %c0_67 = arith.constant 0 : index
    %c5 = arith.constant 5 : index
    %148 = vector.load %arg5[%c0_67, %c5] : memref<32x8xf32, #tpu.memory_space<vmem>>, vector<32x1xf32>
    %c0_68 = arith.constant 0 : index
    %c4_69 = arith.constant 4 : index
    %149 = vector.load %arg6[%c0_68, %c4_69] : memref<128x8xf32, #tpu.memory_space<vmem>>, vector<128x2xf32>
    %c120_i32 = arith.constant 120 : i32
    %150 = tpu.dynamic_rotate %52 by %c120_i32 dim 1 : vector<32x128xf32>, i32 -> vector<32x128xf32>
    %151 = arith.subf %52, %150 : vector<32x128xf32>
    %152 = math.absf %151 : vector<32x128xf32>
    %c120_i32_70 = arith.constant 120 : i32
    %153 = tpu.dynamic_rotate %51 by %c120_i32_70 dim 1 : vector<32x128xf32>, i32 -> vector<32x128xf32>
    %154 = arith.mulf %51, %153 : vector<32x128xf32>
    %155 = arith.mulf %152, %154 : vector<32x128xf32>
    %cst_71 = arith.constant dense<0.000000e+00> : vector<32x2xf32>
    %156 = tpu.matmul %155, %149, %cst_71 {dimension_numbers = #tpu.dot_dimension_numbers<[1], [0], [0], [1], [0, 0, 1, 1], [], []>} : vector<32x128xf32>, vector<128x2xf32>, vector<32x2xf32> -> vector<32x2xf32>
    %157 = vector.extract_strided_slice %156 {offsets = [0, 1], sizes = [32, 1], strides = [1, 1]} : vector<32x2xf32> to vector<32x1xf32>
    %c2_72 = arith.constant 2 : index
    %c0_73 = arith.constant 0 : index
    %158 = memref.load %arg7[%c2_72, %c0_73] : memref<4x3xf32, #tpu.memory_space<smem>>
    %159 = arith.mulf %157, %147 : vector<32x1xf32>
    %160 = vector.shape_cast %159 : vector<32x1xf32> to vector<1x32x1xf32>
    %cst_74 = arith.constant dense<0.000000e+00> : vector<1xf32>
    %161 = vector.multi_reduction <add>, %160, %cst_74 [1, 2] : vector<1x32x1xf32> to vector<1xf32>
    %162 = vector.shape_cast %161 : vector<1xf32> to vector<1x1x1xf32>
    %163 = vector.extract %162[0, 0, 0] : f32 from vector<1x1x1xf32>
    %164 = arith.addf %158, %163 : f32
    %c2_75 = arith.constant 2 : index
    %c0_76 = arith.constant 0 : index
    %165 = memref.load %arg7[%c2_75, %c0_76] : memref<4x3xf32, #tpu.memory_space<smem>>
    memref.store %164, %arg7[%c2_75, %c0_76] : memref<4x3xf32, #tpu.memory_space<smem>>
    %c40_i32 = arith.constant 40 : i32
    %166 = tpu.dynamic_rotate %50 by %c40_i32 dim 0 : vector<48x128xf32>, i32 -> vector<48x128xf32>
    %167 = vector.extract_strided_slice %166 {offsets = [0, 0], sizes = [32, 128], strides = [1, 1]} : vector<48x128xf32> to vector<32x128xf32>
    %168 = arith.subf %52, %167 : vector<32x128xf32>
    %169 = math.absf %168 : vector<32x128xf32>
    %c40_i32_77 = arith.constant 40 : i32
    %170 = tpu.dynamic_rotate %49 by %c40_i32_77 dim 0 : vector<48x128xf32>, i32 -> vector<48x128xf32>
    %171 = vector.extract_strided_slice %170 {offsets = [0, 0], sizes = [32, 128], strides = [1, 1]} : vector<48x128xf32> to vector<32x128xf32>
    %172 = arith.mulf %51, %171 : vector<32x128xf32>
    %173 = arith.mulf %169, %172 : vector<32x128xf32>
    %cst_78 = arith.constant dense<0.000000e+00> : vector<32x2xf32>
    %174 = tpu.matmul %173, %149, %cst_78 {dimension_numbers = #tpu.dot_dimension_numbers<[1], [0], [0], [1], [0, 0, 1, 1], [], []>} : vector<32x128xf32>, vector<128x2xf32>, vector<32x2xf32> -> vector<32x2xf32>
    %175 = vector.extract_strided_slice %174 {offsets = [0, 0], sizes = [32, 1], strides = [1, 1]} : vector<32x2xf32> to vector<32x1xf32>
    %c2_79 = arith.constant 2 : index
    %c1_80 = arith.constant 1 : index
    %176 = memref.load %arg7[%c2_79, %c1_80] : memref<4x3xf32, #tpu.memory_space<smem>>
    %177 = arith.mulf %175, %148 : vector<32x1xf32>
    %178 = vector.shape_cast %177 : vector<32x1xf32> to vector<1x32x1xf32>
    %cst_81 = arith.constant dense<0.000000e+00> : vector<1xf32>
    %179 = vector.multi_reduction <add>, %178, %cst_81 [1, 2] : vector<1x32x1xf32> to vector<1xf32>
    %180 = vector.shape_cast %179 : vector<1xf32> to vector<1x1x1xf32>
    %181 = vector.extract %180[0, 0, 0] : f32 from vector<1x1x1xf32>
    %182 = arith.addf %176, %181 : f32
    %c2_82 = arith.constant 2 : index
    %c1_83 = arith.constant 1 : index
    %183 = memref.load %arg7[%c2_82, %c1_83] : memref<4x3xf32, #tpu.memory_space<smem>>
    memref.store %182, %arg7[%c2_82, %c1_83] : memref<4x3xf32, #tpu.memory_space<smem>>
    %cst_84 = arith.constant dense<0.000000e+00> : vector<32x2xf32>
    %184 = tpu.matmul %51, %149, %cst_84 {dimension_numbers = #tpu.dot_dimension_numbers<[1], [0], [0], [1], [0, 0, 1, 1], [], []>} : vector<32x128xf32>, vector<128x2xf32>, vector<32x2xf32> -> vector<32x2xf32>
    %185 = vector.extract_strided_slice %184 {offsets = [0, 0], sizes = [32, 1], strides = [1, 1]} : vector<32x2xf32> to vector<32x1xf32>
    %c2_85 = arith.constant 2 : index
    %c2_86 = arith.constant 2 : index
    %186 = memref.load %arg7[%c2_85, %c2_86] : memref<4x3xf32, #tpu.memory_space<smem>>
    %187 = arith.mulf %185, %147 : vector<32x1xf32>
    %188 = vector.shape_cast %187 : vector<32x1xf32> to vector<1x32x1xf32>
    %cst_87 = arith.constant dense<0.000000e+00> : vector<1xf32>
    %189 = vector.multi_reduction <add>, %188, %cst_87 [1, 2] : vector<1x32x1xf32> to vector<1xf32>
    %190 = vector.shape_cast %189 : vector<1xf32> to vector<1x1x1xf32>
    %191 = vector.extract %190[0, 0, 0] : f32 from vector<1x1x1xf32>
    %192 = arith.addf %186, %191 : f32
    %c2_88 = arith.constant 2 : index
    %c2_89 = arith.constant 2 : index
    %193 = memref.load %arg7[%c2_88, %c2_89] : memref<4x3xf32, #tpu.memory_space<smem>>
    memref.store %192, %arg7[%c2_88, %c2_89] : memref<4x3xf32, #tpu.memory_space<smem>>
    %c0_90 = arith.constant 0 : index
    %c6 = arith.constant 6 : index
    %194 = vector.load %arg5[%c0_90, %c6] : memref<32x8xf32, #tpu.memory_space<vmem>>, vector<32x1xf32>
    %c0_91 = arith.constant 0 : index
    %c7 = arith.constant 7 : index
    %195 = vector.load %arg5[%c0_91, %c7] : memref<32x8xf32, #tpu.memory_space<vmem>>, vector<32x1xf32>
    %c0_92 = arith.constant 0 : index
    %c6_93 = arith.constant 6 : index
    %196 = vector.load %arg6[%c0_92, %c6_93] : memref<128x8xf32, #tpu.memory_space<vmem>>, vector<128x2xf32>
    %c116_i32 = arith.constant 116 : i32
    %197 = tpu.dynamic_rotate %52 by %c116_i32 dim 1 : vector<32x128xf32>, i32 -> vector<32x128xf32>
    %198 = arith.subf %52, %197 : vector<32x128xf32>
    %199 = math.absf %198 : vector<32x128xf32>
    %c116_i32_94 = arith.constant 116 : i32
    %200 = tpu.dynamic_rotate %51 by %c116_i32_94 dim 1 : vector<32x128xf32>, i32 -> vector<32x128xf32>
    %201 = arith.mulf %51, %200 : vector<32x128xf32>
    %202 = arith.mulf %199, %201 : vector<32x128xf32>
    %cst_95 = arith.constant dense<0.000000e+00> : vector<32x2xf32>
    %203 = tpu.matmul %202, %196, %cst_95 {dimension_numbers = #tpu.dot_dimension_numbers<[1], [0], [0], [1], [0, 0, 1, 1], [], []>} : vector<32x128xf32>, vector<128x2xf32>, vector<32x2xf32> -> vector<32x2xf32>
    %204 = vector.extract_strided_slice %203 {offsets = [0, 1], sizes = [32, 1], strides = [1, 1]} : vector<32x2xf32> to vector<32x1xf32>
    %c3_96 = arith.constant 3 : index
    %c0_97 = arith.constant 0 : index
    %205 = memref.load %arg7[%c3_96, %c0_97] : memref<4x3xf32, #tpu.memory_space<smem>>
    %206 = arith.mulf %204, %194 : vector<32x1xf32>
    %207 = vector.shape_cast %206 : vector<32x1xf32> to vector<1x32x1xf32>
    %cst_98 = arith.constant dense<0.000000e+00> : vector<1xf32>
    %208 = vector.multi_reduction <add>, %207, %cst_98 [1, 2] : vector<1x32x1xf32> to vector<1xf32>
    %209 = vector.shape_cast %208 : vector<1xf32> to vector<1x1x1xf32>
    %210 = vector.extract %209[0, 0, 0] : f32 from vector<1x1x1xf32>
    %211 = arith.addf %205, %210 : f32
    %c3_99 = arith.constant 3 : index
    %c0_100 = arith.constant 0 : index
    %212 = memref.load %arg7[%c3_99, %c0_100] : memref<4x3xf32, #tpu.memory_space<smem>>
    memref.store %211, %arg7[%c3_99, %c0_100] : memref<4x3xf32, #tpu.memory_space<smem>>
    %c36_i32 = arith.constant 36 : i32
    %213 = tpu.dynamic_rotate %50 by %c36_i32 dim 0 : vector<48x128xf32>, i32 -> vector<48x128xf32>
    %214 = vector.extract_strided_slice %213 {offsets = [0, 0], sizes = [32, 128], strides = [1, 1]} : vector<48x128xf32> to vector<32x128xf32>
    %215 = arith.subf %52, %214 : vector<32x128xf32>
    %216 = math.absf %215 : vector<32x128xf32>
    %c36_i32_101 = arith.constant 36 : i32
    %217 = tpu.dynamic_rotate %49 by %c36_i32_101 dim 0 : vector<48x128xf32>, i32 -> vector<48x128xf32>
    %218 = vector.extract_strided_slice %217 {offsets = [0, 0], sizes = [32, 128], strides = [1, 1]} : vector<48x128xf32> to vector<32x128xf32>
    %219 = arith.mulf %51, %218 : vector<32x128xf32>
    %220 = arith.mulf %216, %219 : vector<32x128xf32>
    %cst_102 = arith.constant dense<0.000000e+00> : vector<32x2xf32>
    %221 = tpu.matmul %220, %196, %cst_102 {dimension_numbers = #tpu.dot_dimension_numbers<[1], [0], [0], [1], [0, 0, 1, 1], [], []>} : vector<32x128xf32>, vector<128x2xf32>, vector<32x2xf32> -> vector<32x2xf32>
    %222 = vector.extract_strided_slice %221 {offsets = [0, 0], sizes = [32, 1], strides = [1, 1]} : vector<32x2xf32> to vector<32x1xf32>
    %c3_103 = arith.constant 3 : index
    %c1_104 = arith.constant 1 : index
    %223 = memref.load %arg7[%c3_103, %c1_104] : memref<4x3xf32, #tpu.memory_space<smem>>
    %224 = arith.mulf %222, %195 : vector<32x1xf32>
    %225 = vector.shape_cast %224 : vector<32x1xf32> to vector<1x32x1xf32>
    %cst_105 = arith.constant dense<0.000000e+00> : vector<1xf32>
    %226 = vector.multi_reduction <add>, %225, %cst_105 [1, 2] : vector<1x32x1xf32> to vector<1xf32>
    %227 = vector.shape_cast %226 : vector<1xf32> to vector<1x1x1xf32>
    %228 = vector.extract %227[0, 0, 0] : f32 from vector<1x1x1xf32>
    %229 = arith.addf %223, %228 : f32
    %c3_106 = arith.constant 3 : index
    %c1_107 = arith.constant 1 : index
    %230 = memref.load %arg7[%c3_106, %c1_107] : memref<4x3xf32, #tpu.memory_space<smem>>
    memref.store %229, %arg7[%c3_106, %c1_107] : memref<4x3xf32, #tpu.memory_space<smem>>
    %cst_108 = arith.constant dense<0.000000e+00> : vector<32x2xf32>
    %231 = tpu.matmul %51, %196, %cst_108 {dimension_numbers = #tpu.dot_dimension_numbers<[1], [0], [0], [1], [0, 0, 1, 1], [], []>} : vector<32x128xf32>, vector<128x2xf32>, vector<32x2xf32> -> vector<32x2xf32>
    %232 = vector.extract_strided_slice %231 {offsets = [0, 0], sizes = [32, 1], strides = [1, 1]} : vector<32x2xf32> to vector<32x1xf32>
    %c3_109 = arith.constant 3 : index
    %c2_110 = arith.constant 2 : index
    %233 = memref.load %arg7[%c3_109, %c2_110] : memref<4x3xf32, #tpu.memory_space<smem>>
    %234 = arith.mulf %232, %194 : vector<32x1xf32>
    %235 = vector.shape_cast %234 : vector<32x1xf32> to vector<1x32x1xf32>
    %cst_111 = arith.constant dense<0.000000e+00> : vector<1xf32>
    %236 = vector.multi_reduction <add>, %235, %cst_111 [1, 2] : vector<1x32x1xf32> to vector<1xf32>
    %237 = vector.shape_cast %236 : vector<1xf32> to vector<1x1x1xf32>
    %238 = vector.extract %237[0, 0, 0] : f32 from vector<1x1x1xf32>
    %239 = arith.addf %233, %238 : f32
    %c3_112 = arith.constant 3 : index
    %c2_113 = arith.constant 2 : index
    %240 = memref.load %arg7[%c3_112, %c2_113] : memref<4x3xf32, #tpu.memory_space<smem>>
    memref.store %239, %arg7[%c3_112, %c2_113] : memref<4x3xf32, #tpu.memory_space<smem>>
    return
  }
  func.func @transform_0(%arg0: i32) -> (i32, i32) {
    %c0_i32 = arith.constant 0 : i32
    %c0_i32_0 = arith.constant 0 : i32
    return %arg0, %c0_i32 : i32, i32
  }
  func.func @transform_1(%arg0: i32) -> (i32, i32) {
    %c0_i32 = arith.constant 0 : i32
    %c0_i32_0 = arith.constant 0 : i32
    return %arg0, %c0_i32 : i32, i32
  }
  func.func @transform_2(%arg0: i32) -> (i32, i32) {
    %c1_i32 = arith.constant 1 : i32
    %0 = arith.addi %arg0, %c1_i32 : i32
    %c2_i32 = arith.constant 2 : i32
    %1 = arith.muli %0, %c2_i32 : i32
    %c1_i32_0 = arith.constant 1 : i32
    %2 = arith.minsi %1, %c1_i32_0 : i32
    %c0_i32 = arith.constant 0 : i32
    %c0_i32_1 = arith.constant 0 : i32
    return %2, %c0_i32 : i32, i32
  }
  func.func @transform_3(%arg0: i32) -> (i32, i32) {
    %c1_i32 = arith.constant 1 : i32
    %0 = arith.addi %arg0, %c1_i32 : i32
    %c2_i32 = arith.constant 2 : i32
    %1 = arith.muli %0, %c2_i32 : i32
    %c1_i32_0 = arith.constant 1 : i32
    %2 = arith.minsi %1, %c1_i32_0 : i32
    %c0_i32 = arith.constant 0 : i32
    %c0_i32_1 = arith.constant 0 : i32
    return %2, %c0_i32 : i32, i32
  }
  func.func @transform_4(%arg0: i32) -> (i32, i32) {
    %c0_i32 = arith.constant 0 : i32
    %c0_i32_0 = arith.constant 0 : i32
    return %arg0, %c0_i32 : i32, i32
  }
  func.func @transform_5(%arg0: i32) -> (i32, i32) {
    %c0_i32 = arith.constant 0 : i32
    %c0_i32_0 = arith.constant 0 : i32
    %c0_i32_1 = arith.constant 0 : i32
    return %c0_i32, %c0_i32_0 : i32, i32
  }
  func.func @transform_6(%arg0: i32) -> (i32, i32) {
    %c0_i32 = arith.constant 0 : i32
    %c0_i32_0 = arith.constant 0 : i32
    %c0_i32_1 = arith.constant 0 : i32
    return %c0_i32, %c0_i32_0 : i32, i32
  }
}

</mosaic_0001>

<llo_original>
// kernel: tpu_custom_call.1
$region0: #{tpu_custom_call.1}
  #allocation0 [shape = 'u32[]', space=smem, size = 0x4, offset = 0x4, fixed_abs, tag = 'smem constant byte address 0x4 - core index']
  #allocation1 [shape = 'u32[144,128]{1,0:T(1,128)}', space=vmem, size = 0x12000, scoped, tag = 'internal scratch']
  %s0 = inlined_call_operand.vmem [shape: f32[32,128], index: 0, kind: input, shape index: {}]
  %s1 = inlined_call_operand.vmem [shape: f32[32,128], index: 1, kind: input, shape index: {}]
  %s2 = inlined_call_operand.vmem [shape: f32[32,128], index: 2, kind: input, shape index: {}]
  %s3 = inlined_call_operand.vmem [shape: f32[32,128], index: 3, kind: input, shape index: {}]
  %s4 = inlined_call_operand.vmem [shape: f32[32,8], index: 4, kind: input, shape index: {}]
  %s5 = inlined_call_operand.vmem [shape: f32[128,8], index: 5, kind: input, shape index: {}]
  %s6 = inlined_call_operand.hbm [shape: f32[4,3], index: 6, kind: output, shape index: {}]
  %s7 = sld [smem:[#allocation0]]
  $region38: #{tpu_custom_call.1} parent=0
    _
  %s9 = ssub.s32 1, %s7
  %s10 = scalar_select 0, %s9, %s7
  $region1: #{tpu_custom_call.1} parent=0
    #allocation2 [shape = 'u8[2048]{0}', space=smem, size = 0x800, scoped, tag = 'output window, operand 0, single buffered']
    #allocation3 [shape = 's32[1]{0}', space=sflag, size = 0x4, scoped, tag = 'scoped memory for tpu_custom_call.1']
    %11 = vsyncpa [#allocation3], 0
    // Predicated region
    $region2: #{tpu_custom_call.1} parent=1 // pred_check
      _
    $region3: #{tpu_custom_call.1} parent=1 // pred_check_branch
      %13 = sbr.rel (0) target = $region5
    $region4: #{tpu_custom_call.1} parent=1 // pred_region
      _
    $region5: #{tpu_custom_call.1} parent=1 // pred_fallthru
      _
    // Predicated region
    $region6: #{tpu_custom_call.1} parent=1 // pred_check
      _
    $region7: #{tpu_custom_call.1} parent=1 // pred_check_branch
      %15 = sbr.rel (0) target = $region9
    $region8: #{tpu_custom_call.1} parent=1 // pred_region
      _
    $region9: #{tpu_custom_call.1} parent=1 // pred_fallthru
      _
    // Predicated region
    $region10: #{tpu_custom_call.1} parent=1 // pred_check
      _
    $region11: #{tpu_custom_call.1} parent=1 // pred_check_branch
      %17 = sbr.rel (0) target = $region13
    $region12: #{tpu_custom_call.1} parent=1 // pred_region
      %s18 = sadd.s32 0, 1
      %s19 = smul.u32 %s18, 2
      %p20 = scmp.lt.s32.totalorder %s19, 1
      %s21 = scalar_select %p20, %s19, 1
      %s22 = smul.u32 2, %s21
      %p23 = scmp.lt.s32.totalorder %s22, 3
      %s24 = scalar_select %p23, %s22, 3
      %s25 = smul.addr %s24, 8
      %s26 = scalar_lea.vmem %s2, %s25
      %s27 = sadd.s32 0, 1
      %s28 = smul.u32 %s27, 2
      %p29 = scmp.lt.s32.totalorder %s28, 1
      %s30 = scalar_select %p29, %s28, 1
      %s31 = smul.u32 2, %s30
    $region13: #{tpu_custom_call.1} parent=1 // pred_fallthru
      _
    // Predicated region
    $region14: #{tpu_custom_call.1} parent=1 // pred_check
      _
    $region15: #{tpu_custom_call.1} parent=1 // pred_check_branch
      %33 = sbr.rel (0) target = $region17
    $region16: #{tpu_custom_call.1} parent=1 // pred_region
      %s34 = sadd.s32 0, 1
      %s35 = smul.u32 %s34, 2
      %p36 = scmp.lt.s32.totalorder %s35, 1
      %s37 = scalar_select %p36, %s35, 1
      %s38 = smul.u32 2, %s37
      %p39 = scmp.lt.s32.totalorder %s38, 3
      %s40 = scalar_select %p39, %s38, 3
      %s41 = smul.addr %s40, 8
      %s42 = scalar_lea.vmem %s3, %s41
      %s43 = sadd.s32 0, 1
      %s44 = smul.u32 %s43, 2
      %p45 = scmp.lt.s32.totalorder %s44, 1
      %s46 = scalar_select %p45, %s44, 1
      %s47 = smul.u32 2, %s46
    $region17: #{tpu_custom_call.1} parent=1 // pred_fallthru
      _
    // Predicated region
    $region18: #{tpu_custom_call.1} parent=1 // pred_check
      _
    $region19: #{tpu_custom_call.1} parent=1 // pred_check_branch
      %49 = sbr.rel (0) target = $region21
    $region20: #{tpu_custom_call.1} parent=1 // pred_region
      _
    $region21: #{tpu_custom_call.1} parent=1 // pred_fallthru
      _
    // Predicated region
    $region22: #{tpu_custom_call.1} parent=1 // pred_check
      _
    $region23: #{tpu_custom_call.1} parent=1 // pred_check_branch
      %51 = sbr.rel (0) target = $region25
    $region24: #{tpu_custom_call.1} parent=1 // pred_region
      _
    $region25: #{tpu_custom_call.1} parent=1 // pred_fallthru
      _
    %s52 = sadd.s32 0, 1
    %s53 = smul.u32 %s52, 2
    %p54 = scmp.lt.s32.totalorder %s53, 1
    %s55 = scalar_select %p54, %s53, 1
    %s56 = smul.u32 2, %s55
    %p57 = scmp.lt.s32.totalorder %s56, 3
    %s58 = scalar_select %p57, %s56, 3
    %s59 = smul.addr %s58, 8
    %s60 = scalar_lea.vmem %s2, %s59
    %s61 = sadd.s32 0, 1
    %s62 = smul.u32 %s61, 2
    %p63 = scmp.lt.s32.totalorder %s62, 1
    %s64 = scalar_select %p63, %s62, 1
    %s65 = smul.u32 2, %s64
    %p66 = scmp.lt.s32.totalorder %s65, 3
    %s67 = scalar_select %p66, %s65, 3
    %s68 = smul.addr %s67, 8
    %s69 = scalar_lea.vmem %s3, %s68
    %s70 = sadd.s32 0, 1
    %s71 = smul.u32 %s70, 2
    %p72 = scmp.lt.s32.totalorder %s71, 1
    %s73 = scalar_select %p72, %s71, 1
    %s74 = smul.u32 2, %s73
    %p75 = scmp.lt.s32.totalorder %s74, 3
    %s76 = scalar_select %p75, %s74, 3
    %s77 = smul.addr %s76, 8
    %s78 = scalar_lea.vmem %s2, %s77
    %s79 = sadd.s32 0, 1
    %s80 = smul.u32 %s79, 2
    %p81 = scmp.lt.s32.totalorder %s80, 1
    %s82 = scalar_select %p81, %s80, 1
    %s83 = smul.u32 2, %s82
    %s84 = sadd.s32 0, 1
    %s85 = smul.u32 %s84, 2
    %p86 = scmp.lt.s32.totalorder %s85, 1
    %s87 = scalar_select %p86, %s85, 1
    %s88 = smul.u32 2, %s87
    %p89 = scmp.lt.s32.totalorder %s88, 3
    %s90 = scalar_select %p89, %s88, 3
    %s91 = smul.addr %s90, 8
    %s92 = scalar_lea.vmem %s3, %s91
    %s93 = sadd.s32 0, 1
    %s94 = smul.u32 %s93, 2
    %p95 = scmp.lt.s32.totalorder %s94, 1
    %s96 = scalar_select %p95, %s94, 1
    %s97 = smul.u32 2, %s96
    %p98 = scmp.eq.s32.totalorder 0, 0
    // Predicated region
    $region26: #{tpu_custom_call.1} parent=1 // pred_check
      %p99 = pneg %p98
    $region27: #{tpu_custom_call.1} parent=1 // pred_check_branch
      %101 = sbr.rel (%p99) target = $region29
    $region28: #{tpu_custom_call.1} parent=1 // pred_region
      %s102 = scalar_lea.smem [#allocation2], 0
      %103 = sst [smem:[%s102]] 0.0
      %s104 = scalar_lea.smem [#allocation2], 1
      %105 = sst [smem:[%s104]] 0.0
      %s106 = scalar_lea.smem [#allocation2], 2
      %107 = sst [smem:[%s106]] 0.0
      %s108 = scalar_lea.smem [#allocation2], 128
      %109 = sst [smem:[%s108]] 0.0
      %s110 = scalar_lea.smem [#allocation2], 129
      %111 = sst [smem:[%s110]] 0.0
      %s112 = scalar_lea.smem [#allocation2], 130
      %113 = sst [smem:[%s112]] 0.0
      %s114 = scalar_lea.smem [#allocation2], 256
      %115 = sst [smem:[%s114]] 0.0
      %s116 = scalar_lea.smem [#allocation2], 257
      %117 = sst [smem:[%s116]] 0.0
      %s118 = scalar_lea.smem [#allocation2], 258
      %119 = sst [smem:[%s118]] 0.0
      %s120 = scalar_lea.smem [#allocation2], 384
      %121 = sst [smem:[%s120]] 0.0
      %s122 = scalar_lea.smem [#allocation2], 385
      %123 = sst [smem:[%s122]] 0.0
      %s124 = scalar_lea.smem [#allocation2], 386
      %125 = sst [smem:[%s124]] 0.0
    $region29: #{tpu_custom_call.1} parent=1 // pred_fallthru
      _
    %s126 = smul.u32 0, 32
    %v127 = vlaneseq
    %v128 = vshrl.u32 %v127, 7
    %v129 = vadd.s32 %v128, 8
    %v130 = vadd.s32 %v128, 16
    %v131 = vadd.s32 %v128, 24
    %v132 = vstv %s126
    %v133 = vadd.s32 %v132, %v128
    %v134 = vadd.s32 %v132, %v129
    %v135 = vadd.s32 %v132, %v130
    %v136 = vadd.s32 %v132, %v131
    %s137 = sadd.s32 0, 1
    %s138 = smul.u32 %s137, 32
    %p139 = scmp.lt.s32.totalorder %s138, 16
    %s140 = scalar_select %p139, %s138, 16
    %v141 = vstv %s140
    %v142 = vadd.s32 %v141, %v128
    %v143 = vadd.s32 %v141, %v129
    %v144 = vlaneseq
    %v145 = vand.u32 %v144, 127
    %vm146 = vcmp.lt.s32.totalorder %v145, 128
    %vm147 = vcmp.lt.s32.totalorder %v133, 32
    %vm148 = vcmp.lt.s32.totalorder %v134, 32
    %vm149 = vcmp.lt.s32.totalorder %v135, 32
    %vm150 = vcmp.lt.s32.totalorder %v136, 32
    %v151 = vsel %vm147, 1, 0
    %v152 = vsel %vm148, 1, 0
    %v153 = vsel %vm149, 1, 0
    %v154 = vsel %vm150, 1, 0
    %vm155 = vcmp.eq.s32.totalorder %v151, 1
    %vm156 = vcmp.eq.s32.totalorder %v152, 1
    %vm157 = vcmp.eq.s32.totalorder %v153, 1
    %vm158 = vcmp.eq.s32.totalorder %v154, 1
    %v159 = vsel %vm146, 1, 0
    %vm160 = vcmp.eq.s32.totalorder %v159, 1
    %vm161 = vmand %vm155, %vm160
    %vm162 = vmand %vm156, %vm160
    %vm163 = vmand %vm157, %vm160
    %vm164 = vmand %vm158, %vm160
    %vm165 = vcmp.lt.s32.totalorder %v142, 32
    %vm166 = vcmp.lt.s32.totalorder %v143, 32
    %v167 = vsel %vm165, 1, 0
    %v168 = vsel %vm166, 1, 0
    %vm169 = vcmp.eq.s32.totalorder %v167, 1
    %vm170 = vcmp.eq.s32.totalorder %v168, 1
    %vm171 = vmand %vm169, %vm160
    %vm172 = vmand %vm170, %vm160
    %v173 = vld [vmem:[%s0] sm:$0xff]
    %v174 = vld [vmem:[%s0 + $0x8] sm:$0xff]
    %v175 = vld [vmem:[%s0 + $0x10] sm:$0xff]
    %v176 = vld [vmem:[%s0 + $0x18] sm:$0xff]
    %v177 = vsel %vm161, %v173, 1.0
    %v178 = vsel %vm162, %v174, 1.0
    %v179 = vsel %vm163, %v175, 1.0
    %v180 = vsel %vm164, %v176, 1.0
    %v181 = vld [vmem:[%s78] sm:$0xff]
    %v182 = vld [vmem:[%s78 + $0x8] sm:$0xff]
    %v183 = vsel %vm171, %v181, 1.0
    %v184 = vsel %vm172, %v182, 1.0
    %v185 = vld [vmem:[%s1] sm:$0xff]
    %v186 = vld [vmem:[%s1 + $0x8] sm:$0xff]
    %v187 = vld [vmem:[%s1 + $0x10] sm:$0xff]
    %v188 = vld [vmem:[%s1 + $0x18] sm:$0xff]
    %v189 = vsel %vm161, %v185, 1.0
    %v190 = vsel %vm162, %v186, 1.0
    %v191 = vsel %vm163, %v187, 1.0
    %v192 = vsel %vm164, %v188, 1.0
    %v193 = vld [vmem:[%s92] sm:$0xff]
    %v194 = vld [vmem:[%s92 + $0x8] sm:$0xff]
    %v195 = vsel %vm171, %v193, 1.0
    %v196 = vsel %vm172, %v194, 1.0
    %v197 = vadd.f32 %v177, 0.001
    %v198 = vadd.f32 %v178, 0.001
    %v199 = vadd.f32 %v179, 0.001
    %v200 = vadd.f32 %v180, 0.001
    %v201 = vadd.f32 %v183, 0.001
    %v202 = vadd.f32 %v184, 0.001
    %v203 = vadd.f32 %v189, 0.001
    %v204 = vadd.f32 %v190, 0.001
    %v205 = vadd.f32 %v191, 0.001
    %v206 = vadd.f32 %v192, 0.001
    %v207 = vadd.f32 %v195, 0.001
    %v208 = vadd.f32 %v196, 0.001
    %v209 = vrcp.pop %v203
    %v210 = vmul.f32 %v197, %v209
    %v211 = vrcp.pop %v204
    %v212 = vmul.f32 %v198, %v211
    %v213 = vrcp.pop %v205
    %v214 = vmul.f32 %v199, %v213
    %v215 = vrcp.pop %v206
    %v216 = vmul.f32 %v200, %v215
    %v217 = vrcp.pop %v207
    %v218 = vmul.f32 %v201, %v217
    %v219 = vrcp.pop %v208
    %v220 = vmul.f32 %v202, %v219
    %v221 = vlog2.pop %v210
    %v222 = vmul.f32 %v221, 0.6931472
    %v223 = vlog2.pop %v212
    %v224 = vmul.f32 %v223, 0.6931472
    %v225 = vlog2.pop %v214
    %v226 = vmul.f32 %v225, 0.6931472
    %v227 = vlog2.pop %v216
    %v228 = vmul.f32 %v227, 0.6931472
    %v229 = vlog2.pop %v218
    %v230 = vmul.f32 %v229, 0.6931472
    %v231 = vlog2.pop %v220
    %v232 = vmul.f32 %v231, 0.6931472
    %vm233 = vcmp.gt.f32.partialorder %v189, 0.0
    %vm234 = vcmp.gt.f32.partialorder %v190, 0.0
    %vm235 = vcmp.gt.f32.partialorder %v191, 0.0
    %vm236 = vcmp.gt.f32.partialorder %v192, 0.0
    %vm237 = vcmp.gt.f32.partialorder %v195, 0.0
    %vm238 = vcmp.gt.f32.partialorder %v196, 0.0
    %v239 = vsel %vm233, 1, 0
    %v240 = vsel %vm234, 1, 0
    %v241 = vsel %vm235, 1, 0
    %v242 = vsel %vm236, 1, 0
    %v243 = vsel %vm237, 1, 0
    %v244 = vsel %vm238, 1, 0
    %v245 = vcvt.s32.f32 %v239
    %v246 = vcvt.s32.f32 %v240
    %v247 = vcvt.s32.f32 %v241
    %v248 = vcvt.s32.f32 %v242
    %v249 = vcvt.s32.f32 %v243
    %v250 = vcvt.s32.f32 %v244
    %v251 = vmul.f32 %v222, %v245
    %v252 = vmul.f32 %v224, %v246
    %v253 = vmul.f32 %v226, %v247
    %v254 = vmul.f32 %v228, %v248
    %v255 = vmul.f32 %v230, %v249
    %v256 = vmul.f32 %v232, %v250
    %v257 = vld [vmem:[%s4] sm:$0xff]
    %v258 = vld [vmem:[%s4 + $0x8] sm:$0xff]
    %v259 = vld [vmem:[%s4 + $0x10] sm:$0xff]
    %v260 = vld [vmem:[%s4 + $0x18] sm:$0xff]
    %v261 = vld [vmem:[%s5] sm:$0xff]
    %v262 = vld [vmem:[%s5 + $0x8] sm:$0xff]
    %v263 = vld [vmem:[%s5 + $0x10] sm:$0xff]
    %v264 = vld [vmem:[%s5 + $0x18] sm:$0xff]
    %v265 = vld [vmem:[%s5 + $0x20] sm:$0xff]
    %v266 = vld [vmem:[%s5 + $0x28] sm:$0xff]
    %v267 = vld [vmem:[%s5 + $0x30] sm:$0xff]
    %v268 = vld [vmem:[%s5 + $0x38] sm:$0xff]
    %v269 = vld [vmem:[%s5 + $0x40] sm:$0xff]
    %v270 = vld [vmem:[%s5 + $0x48] sm:$0xff]
    %v271 = vld [vmem:[%s5 + $0x50] sm:$0xff]
    %v272 = vld [vmem:[%s5 + $0x58] sm:$0xff]
    %v273 = vld [vmem:[%s5 + $0x60] sm:$0xff]
    %v274 = vld [vmem:[%s5 + $0x68] sm:$0xff]
    %v275 = vld [vmem:[%s5 + $0x70] sm:$0xff]
    %v276 = vld [vmem:[%s5 + $0x78] sm:$0xff]
    %277 = vrot.lane.b32.xlu0 %v251, 126
    %v278 = vpop.permute.xlu0 %277
    %279 = vrot.lane.b32.xlu0 %v252, 126
    %v280 = vpop.permute.xlu0 %279
    %281 = vrot.lane.b32.xlu0 %v253, 126
    %v282 = vpop.permute.xlu0 %281
    %283 = vrot.lane.b32.xlu0 %v254, 126
    %v284 = vpop.permute.xlu0 %283
    %v285 = vsub.f32 %v251, %v278
    %v286 = vsub.f32 %v252, %v280
    %v287 = vsub.f32 %v253, %v282
    %v288 = vsub.f32 %v254, %v284
    %v289 = vand.u32 2147483647, %v285
    %v290 = vand.u32 2147483647, %v286
    %v291 = vand.u32 2147483647, %v287
    %v292 = vand.u32 2147483647, %v288
    %293 = vrot.lane.b32.xlu0 %v245, 126
    %v294 = vpop.permute.xlu0 %293
    %295 = vrot.lane.b32.xlu0 %v246, 126
    %v296 = vpop.permute.xlu0 %295
    %297 = vrot.lane.b32.xlu0 %v247, 126
    %v298 = vpop.permute.xlu0 %297
    %299 = vrot.lane.b32.xlu0 %v248, 126
    %v300 = vpop.permute.xlu0 %299
    %v301 = vmul.f32 %v245, %v294
    %v302 = vmul.f32 %v246, %v296
    %v303 = vmul.f32 %v247, %v298
    %v304 = vmul.f32 %v248, %v300
    %v305 = vmul.f32 %v289, %v301
    %v306 = vmul.f32 %v290, %v302
    %v307 = vmul.f32 %v291, %v303
    %v308 = vmul.f32 %v292, %v304
    %309 = vmatprep.subr.mxu0 0.0
    %310 = vmatpush1.msra.mxu0 %v261
    %311 = vmatprep.subr.mxu0 0.0
    %312 = vmatpush1.msra.mxu0 %v262
    %313 = vmatprep.subr.mxu0 0.0
    %314 = vmatpush1.msra.mxu0 %v263
    %315 = vmatprep.subr.mxu0 0.0
    %316 = vmatpush1.msra.mxu0 %v264
    %317 = vmatprep.subr.mxu0 0.0
    %318 = vmatpush1.msra.mxu0 %v265
    %319 = vmatprep.subr.mxu0 0.0
    %320 = vmatpush1.msra.mxu0 %v266
    %321 = vmatprep.subr.mxu0 0.0
    %322 = vmatpush1.msra.mxu0 %v267
    %323 = vmatprep.subr.mxu0 0.0
    %324 = vmatpush1.msra.mxu0 %v268
    %325 = vmatprep.subr.mxu0 0.0
    %326 = vmatpush1.msra.mxu0 %v269
    %327 = vmatprep.subr.mxu0 0.0
    %328 = vmatpush1.msra.mxu0 %v270
    %329 = vmatprep.subr.mxu0 0.0
    %330 = vmatpush1.msra.mxu0 %v271
    %331 = vmatprep.subr.mxu0 0.0
    %332 = vmatpush1.msra.mxu0 %v272
    %333 = vmatprep.subr.mxu0 0.0
    %334 = vmatpush1.msra.mxu0 %v273
    %335 = vmatprep.subr.mxu0 0.0
    %336 = vmatpush1.msra.mxu0 %v274
    %337 = vmatprep.subr.mxu0 0.0
    %338 = vmatpush1.msra.mxu0 %v275
    %339 = vmatprep.subr.mxu0 0.0
    %340 = vmatpush1.msra.mxu0 %v276
    %341 = vmatprep.subr.mxu0 0.0
    %342 = vmatpush1.msra.mxu0 0.0
    %343 = vmatprep.subr.mxu0 0.0
    %344 = vmatpush1.msra.mxu0 0.0
    %345 = vmatprep.subr.mxu0 0.0
    %346 = vmatpush1.msra.mxu0 0.0
    %347 = vmatprep.subr.mxu0 0.0
    %348 = vmatpush1.msra.mxu0 0.0
    %349 = vmatprep.subr.mxu0 0.0
    %350 = vmatpush1.msra.mxu0 0.0
    %351 = vmatprep.subr.mxu0 0.0
    %352 = vmatpush1.msra.mxu0 0.0
    %353 = vmatprep.subr.mxu0 0.0
    %354 = vmatpush1.msra.mxu0 0.0
    %355 = vmatprep.subr.mxu0 0.0
    %356 = vmatpush1.msra.mxu0 0.0
    %357 = vmatprep.subr.mxu0 0.0
    %358 = vmatpush1.msra.mxu0 0.0
    %359 = vmatprep.subr.mxu0 0.0
    %360 = vmatpush1.msra.mxu0 0.0
    %361 = vmatprep.subr.mxu0 0.0
    %362 = vmatpush1.msra.mxu0 0.0
    %363 = vmatprep.subr.mxu0 0.0
    %364 = vmatpush1.msra.mxu0 0.0
    %365 = vmatprep.subr.mxu0 0.0
    %366 = vmatpush1.msra.mxu0 0.0
    %367 = vmatprep.subr.mxu0 0.0
    %368 = vmatpush1.msra.mxu0 0.0
    %369 = vmatprep.subr.mxu0 0.0
    %370 = vmatpush1.msra.mxu0 0.0
    %371 = vmatprep.subr.mxu0 0.0
    %372 = vmatpush1.msra.mxu0 0.0
    %373 = vmatprep.mubr.f32.mxu0 0.0
    %374 = vmatmul.mubr.f32.gmra.mrb[0].mxu0 %v305
    %v375 = vpop.f32.mrb[0].mxu0
    %v376 = vadd.f32 0.0, %v375
    %v377 = vpop.f32.mrb[0].mxu0
    %378 = vmatprep.mubr.f32.mxu0 0.0
    %379 = vmatmul.mubr.f32.gmra.mrb[0].mxu0 %v306
    %v380 = vpop.f32.mrb[0].mxu0
    %v381 = vadd.f32 0.0, %v380
    %v382 = vpop.f32.mrb[0].mxu0
    %383 = vmatprep.mubr.f32.mxu0 0.0
    %384 = vmatmul.mubr.f32.gmra.mrb[0].mxu0 %v307
    %v385 = vpop.f32.mrb[0].mxu0
    %v386 = vadd.f32 0.0, %v385
    %v387 = vpop.f32.mrb[0].mxu0
    %388 = vmatprep.mubr.f32.mxu0 0.0
    %389 = vmatmul.mubr.f32.gmra.mrb[0].mxu0 %v308
    %v390 = vpop.f32.mrb[0].mxu0
    %v391 = vadd.f32 0.0, %v390
    %v392 = vpop.f32.mrb[0].mxu0
    %393 = vdwg.mxu0
    %s394 = sld [smem:[#allocation2]]
    %399 = vrot.lane.b32.xlu0 %v257, 1
    %v400 = vpop.permute.xlu0 %399
    %401 = vrot.lane.b32.xlu0 %v258, 1
    %v402 = vpop.permute.xlu0 %401
    %403 = vrot.lane.b32.xlu0 %v259, 1
    %v404 = vpop.permute.xlu0 %403
    %405 = vrot.lane.b32.xlu0 %v260, 1
    %v406 = vpop.permute.xlu0 %405
    %v411 = vmul.f32 %v376, %v400
    %v412 = vmul.f32 %v381, %v402
    %v413 = vmul.f32 %v386, %v404
    %v414 = vmul.f32 %v391, %v406
    %419 = vrot.lane.b32.xlu0 %v411, 127
    %v420 = vpop.permute.xlu0 %419
    %421 = vrot.lane.b32.xlu0 %v412, 127
    %v422 = vpop.permute.xlu0 %421
    %423 = vrot.lane.b32.xlu0 %v413, 127
    %v424 = vpop.permute.xlu0 %423
    %425 = vrot.lane.b32.xlu0 %v414, 127
    %v426 = vpop.permute.xlu0 %425
    %vm431 = vcmask 7168
    %v432 = vsel %vm431, %v420, 0.0
    %v433 = vsel %vm431, %v422, 0.0
    %v434 = vadd.f32 %v432, %v433
    %v435 = vsel %vm431, %v424, 0.0
    %v436 = vadd.f32 %v434, %v435
    %v437 = vsel %vm431, %v426, 0.0
    %v438 = vadd.f32 %v436, %v437
    %439 = vadd.xlane.f32.xlu0 %v438
    %v440 = vpop.xlane.xlu0 %439
    %v441 = vrot.slane %v440, 4
    %v442 = vadd.f32 %v440, %v441
    %v443 = vrot.slane %v442, 2
    %v444 = vadd.f32 %v442, %v443
    %v445 = vrot.slane %v444, 1
    %v446 = vadd.f32 %v444, %v445
    %s447 = vtos %v446
    %s448 = sadd.f32 %s394, %s447
    %s449 = scalar_lea.smem [#allocation2], 0
    %450 = sst [smem:[%s449]] %s448
    %v451 = vrot.slane %v251, 2
    %v452 = vrot.slane %v252, 2
    %v453 = vrot.slane %v253, 2
    %v454 = vrot.slane %v254, 2
    %v455 = vrot.slane %v255, 2
    %vm456 = vcmp.lt.s32.totalorder %v128, 6
    %v457 = vsel %vm456, %v454, %v455
    %v458 = vsel %vm456, %v453, %v454
    %v459 = vsel %vm456, %v452, %v453
    %v460 = vsel %vm456, %v451, %v452
    %v461 = vsub.f32 %v251, %v460
    %v462 = vsub.f32 %v252, %v459
    %v463 = vsub.f32 %v253, %v458
    %v464 = vsub.f32 %v254, %v457
    %v465 = vand.u32 2147483647, %v461
    %v466 = vand.u32 2147483647, %v462
    %v467 = vand.u32 2147483647, %v463
    %v468 = vand.u32 2147483647, %v464
    %v469 = vrot.slane %v245, 2
    %v470 = vrot.slane %v246, 2
    %v471 = vrot.slane %v247, 2
    %v472 = vrot.slane %v248, 2
    %v473 = vrot.slane %v249, 2
    %v474 = vsel %vm456, %v472, %v473
    %v475 = vsel %vm456, %v471, %v472
    %v476 = vsel %vm456, %v470, %v471
    %v477 = vsel %vm456, %v469, %v470
    %v478 = vmul.f32 %v245, %v477
    %v479 = vmul.f32 %v246, %v476
    %v480 = vmul.f32 %v247, %v475
    %v481 = vmul.f32 %v248, %v474
    %v482 = vmul.f32 %v465, %v478
    %v483 = vmul.f32 %v466, %v479
    %v484 = vmul.f32 %v467, %v480
    %v485 = vmul.f32 %v468, %v481
    %486 = vmatprep.subr.mxu0 0.0
    %487 = vmatpush1.msra.mxu0 %v261
    %488 = vmatprep.subr.mxu0 0.0
    %489 = vmatpush1.msra.mxu0 %v262
    %490 = vmatprep.subr.mxu0 0.0
    %491 = vmatpush1.msra.mxu0 %v263
    %492 = vmatprep.subr.mxu0 0.0
    %493 = vmatpush1.msra.mxu0 %v264
    %494 = vmatprep.subr.mxu0 0.0
    %495 = vmatpush1.msra.mxu0 %v265
    %496 = vmatprep.subr.mxu0 0.0
    %497 = vmatpush1.msra.mxu0 %v266
    %498 = vmatprep.subr.mxu0 0.0
    %499 = vmatpush1.msra.mxu0 %v267
    %500 = vmatprep.subr.mxu0 0.0
    %501 = vmatpush1.msra.mxu0 %v268
    %502 = vmatprep.subr.mxu0 0.0
    %503 = vmatpush1.msra.mxu0 %v269
    %504 = vmatprep.subr.mxu0 0.0
    %505 = vmatpush1.msra.mxu0 %v270
    %506 = vmatprep.subr.mxu0 0.0
    %507 = vmatpush1.msra.mxu0 %v271
    %508 = vmatprep.subr.mxu0 0.0
    %509 = vmatpush1.msra.mxu0 %v272
    %510 = vmatprep.subr.mxu0 0.0
    %511 = vmatpush1.msra.mxu0 %v273
    %512 = vmatprep.subr.mxu0 0.0
    %513 = vmatpush1.msra.mxu0 %v274
    %514 = vmatprep.subr.mxu0 0.0
    %515 = vmatpush1.msra.mxu0 %v275
    %516 = vmatprep.subr.mxu0 0.0
    %517 = vmatpush1.msra.mxu0 %v276
    %518 = vmatprep.subr.mxu0 0.0
    %519 = vmatpush1.msra.mxu0 0.0
    %520 = vmatprep.subr.mxu0 0.0
    %521 = vmatpush1.msra.mxu0 0.0
    %522 = vmatprep.subr.mxu0 0.0
    %523 = vmatpush1.msra.mxu0 0.0
    %524 = vmatprep.subr.mxu0 0.0
    %525 = vmatpush1.msra.mxu0 0.0
    %526 = vmatprep.subr.mxu0 0.0
    %527 = vmatpush1.msra.mxu0 0.0
    %528 = vmatprep.subr.mxu0 0.0
    %529 = vmatpush1.msra.mxu0 0.0
    %530 = vmatprep.subr.mxu0 0.0
    %531 = vmatpush1.msra.mxu0 0.0
    %532 = vmatprep.subr.mxu0 0.0
    %533 = vmatpush1.msra.mxu0 0.0
    %534 = vmatprep.subr.mxu0 0.0
    %535 = vmatpush1.msra.mxu0 0.0
    %536 = vmatprep.subr.mxu0 0.0
    %537 = vmatpush1.msra.mxu0 0.0
    %538 = vmatprep.subr.mxu0 0.0
    %539 = vmatpush1.msra.mxu0 0.0
    %540 = vmatprep.subr.mxu0 0.0
    %541 = vmatpush1.msra.mxu0 0.0
    %542 = vmatprep.subr.mxu0 0.0
    %543 = vmatpush1.msra.mxu0 0.0
    %544 = vmatprep.subr.mxu0 0.0
    %545 = vmatpush1.msra.mxu0 0.0
    %546 = vmatprep.subr.mxu0 0.0
    %547 = vmatpush1.msra.mxu0 0.0
    %548 = vmatprep.subr.mxu0 0.0
    %549 = vmatpush1.msra.mxu0 0.0
    %550 = vmatprep.mubr.f32.mxu0 0.0
    %551 = vmatmul.mubr.f32.gmra.mrb[0].mxu0 %v482
    %v552 = vpop.f32.mrb[0].mxu0
    %v553 = vadd.f32 0.0, %v552
    %v554 = vpop.f32.mrb[0].mxu0
    %555 = vmatprep.mubr.f32.mxu0 0.0
    %556 = vmatmul.mubr.f32.gmra.mrb[0].mxu0 %v483
    %v557 = vpop.f32.mrb[0].mxu0
    %v558 = vadd.f32 0.0, %v557
    %v559 = vpop.f32.mrb[0].mxu0
    %560 = vmatprep.mubr.f32.mxu0 0.0
    %561 = vmatmul.mubr.f32.gmra.mrb[0].mxu0 %v484
    %v562 = vpop.f32.mrb[0].mxu0
    %v563 = vadd.f32 0.0, %v562
    %v564 = vpop.f32.mrb[0].mxu0
    %565 = vmatprep.mubr.f32.mxu0 0.0
    %566 = vmatmul.mubr.f32.gmra.mrb[0].mxu0 %v485
    %v567 = vpop.f32.mrb[0].mxu0
    %v568 = vadd.f32 0.0, %v567
    %v569 = vpop.f32.mrb[0].mxu0
    %570 = vdwg.mxu0
    %s571 = sld [smem:[#allocation2 + $0x1]]
    %572 = vrot.lane.b32.xlu0 %v257, 127
    %v573 = vpop.permute.xlu0 %572
    %574 = vrot.lane.b32.xlu0 %v258, 127
    %v575 = vpop.permute.xlu0 %574
    %576 = vrot.lane.b32.xlu0 %v259, 127
    %v577 = vpop.permute.xlu0 %576
    %578 = vrot.lane.b32.xlu0 %v260, 127
    %v579 = vpop.permute.xlu0 %578
    %v584 = vmul.f32 %v553, %v573
    %v585 = vmul.f32 %v558, %v575
    %v586 = vmul.f32 %v563, %v577
    %v587 = vmul.f32 %v568, %v579
    %v588 = vsel %vm431, %v584, 0.0
    %v589 = vsel %vm431, %v585, 0.0
    %v590 = vadd.f32 %v588, %v589
    %v591 = vsel %vm431, %v586, 0.0
    %v592 = vadd.f32 %v590, %v591
    %v593 = vsel %vm431, %v587, 0.0
    %v594 = vadd.f32 %v592, %v593
    %595 = vadd.xlane.f32.xlu0 %v594
    %v596 = vpop.xlane.xlu0 %595
    %v597 = vrot.slane %v596, 4
    %v598 = vadd.f32 %v596, %v597
    %v599 = vrot.slane %v598, 2
    %v600 = vadd.f32 %v598, %v599
    %v601 = vrot.slane %v600, 1
    %v602 = vadd.f32 %v600, %v601
    %s603 = vtos %v602
    %s604 = sadd.f32 %s571, %s603
    %s605 = scalar_lea.smem [#allocation2], 1
    %606 = sst [smem:[%s605]] %s604
    %607 = vmatprep.subr.mxu0 0.0
    %608 = vmatpush1.msra.mxu0 %v261
    %609 = vmatprep.subr.mxu0 0.0
    %610 = vmatpush1.msra.mxu0 %v262
    %611 = vmatprep.subr.mxu0 0.0
    %612 = vmatpush1.msra.mxu0 %v263
    %613 = vmatprep.subr.mxu0 0.0
    %614 = vmatpush1.msra.mxu0 %v264
    %615 = vmatprep.subr.mxu0 0.0
    %616 = vmatpush1.msra.mxu0 %v265
    %617 = vmatprep.subr.mxu0 0.0
    %618 = vmatpush1.msra.mxu0 %v266
    %619 = vmatprep.subr.mxu0 0.0
    %620 = vmatpush1.msra.mxu0 %v267
    %621 = vmatprep.subr.mxu0 0.0
    %622 = vmatpush1.msra.mxu0 %v268
    %623 = vmatprep.subr.mxu0 0.0
    %624 = vmatpush1.msra.mxu0 %v269
    %625 = vmatprep.subr.mxu0 0.0
    %626 = vmatpush1.msra.mxu0 %v270
    %627 = vmatprep.subr.mxu0 0.0
    %628 = vmatpush1.msra.mxu0 %v271
    %629 = vmatprep.subr.mxu0 0.0
    %630 = vmatpush1.msra.mxu0 %v272
    %631 = vmatprep.subr.mxu0 0.0
    %632 = vmatpush1.msra.mxu0 %v273
    %633 = vmatprep.subr.mxu0 0.0
    %634 = vmatpush1.msra.mxu0 %v274
    %635 = vmatprep.subr.mxu0 0.0
    %636 = vmatpush1.msra.mxu0 %v275
    %637 = vmatprep.subr.mxu0 0.0
    %638 = vmatpush1.msra.mxu0 %v276
    %639 = vmatprep.subr.mxu0 0.0
    %640 = vmatpush1.msra.mxu0 0.0
    %641 = vmatprep.subr.mxu0 0.0
    %642 = vmatpush1.msra.mxu0 0.0
    %643 = vmatprep.subr.mxu0 0.0
    %644 = vmatpush1.msra.mxu0 0.0
    %645 = vmatprep.subr.mxu0 0.0
    %646 = vmatpush1.msra.mxu0 0.0
    %647 = vmatprep.subr.mxu0 0.0
    %648 = vmatpush1.msra.mxu0 0.0
    %649 = vmatprep.subr.mxu0 0.0
    %650 = vmatpush1.msra.mxu0 0.0
    %651 = vmatprep.subr.mxu0 0.0
    %652 = vmatpush1.msra.mxu0 0.0
    %653 = vmatprep.subr.mxu0 0.0
    %654 = vmatpush1.msra.mxu0 0.0
    %655 = vmatprep.subr.mxu0 0.0
    %656 = vmatpush1.msra.mxu0 0.0
    %657 = vmatprep.subr.mxu0 0.0
    %658 = vmatpush1.msra.mxu0 0.0
    %659 = vmatprep.subr.mxu0 0.0
    %660 = vmatpush1.msra.mxu0 0.0
    %661 = vmatprep.subr.mxu0 0.0
    %662 = vmatpush1.msra.mxu0 0.0
    %663 = vmatprep.subr.mxu0 0.0
    %664 = vmatpush1.msra.mxu0 0.0
    %665 = vmatprep.subr.mxu0 0.0
    %666 = vmatpush1.msra.mxu0 0.0
    %667 = vmatprep.subr.mxu0 0.0
    %668 = vmatpush1.msra.mxu0 0.0
    %669 = vmatprep.subr.mxu0 0.0
    %670 = vmatpush1.msra.mxu0 0.0
    %671 = vmatprep.mubr.f32.mxu0 0.0
    %672 = vmatmul.mubr.f32.gmra.mrb[0].mxu0 %v245
    %v673 = vpop.f32.mrb[0].mxu0
    %v674 = vadd.f32 0.0, %v673
    %v675 = vpop.f32.mrb[0].mxu0
    %676 = vmatprep.mubr.f32.mxu0 0.0
    %677 = vmatmul.mubr.f32.gmra.mrb[0].mxu0 %v246
    %v678 = vpop.f32.mrb[0].mxu0
    %v679 = vadd.f32 0.0, %v678
    %v680 = vpop.f32.mrb[0].mxu0
    %681 = vmatprep.mubr.f32.mxu0 0.0
    %682 = vmatmul.mubr.f32.gmra.mrb[0].mxu0 %v247
    %v683 = vpop.f32.mrb[0].mxu0
    %v684 = vadd.f32 0.0, %v683
    %v685 = vpop.f32.mrb[0].mxu0
    %686 = vmatprep.mubr.f32.mxu0 0.0
    %687 = vmatmul.mubr.f32.gmra.mrb[0].mxu0 %v248
    %v688 = vpop.f32.mrb[0].mxu0
    %v689 = vadd.f32 0.0, %v688
    %v690 = vpop.f32.mrb[0].mxu0
    %691 = vdwg.mxu0
    %s692 = sld [smem:[#allocation2 + $0x2]]
    %v693 = vmul.f32 %v674, %v257
    %v694 = vmul.f32 %v679, %v258
    %v695 = vmul.f32 %v684, %v259
    %v696 = vmul.f32 %v689, %v260
    %v697 = vsel %vm431, %v693, 0.0
    %v698 = vsel %vm431, %v694, 0.0
    %v699 = vadd.f32 %v697, %v698
    %v700 = vsel %vm431, %v695, 0.0
    %v701 = vadd.f32 %v699, %v700
    %v702 = vsel %vm431, %v696, 0.0
    %v703 = vadd.f32 %v701, %v702
    %704 = vadd.xlane.f32.xlu0 %v703
    %v705 = vpop.xlane.xlu0 %704
    %v706 = vrot.slane %v705, 4
    %v707 = vadd.f32 %v705, %v706
    %v708 = vrot.slane %v707, 2
    %v709 = vadd.f32 %v707, %v708
    %v710 = vrot.slane %v709, 1
    %v711 = vadd.f32 %v709, %v710
    %s712 = vtos %v711
    %s713 = sadd.f32 %s692, %s712
    %s714 = scalar_lea.smem [#allocation2], 2
    %715 = sst [smem:[%s714]] %s713
    %v716 = vld [vmem:[%s4] sm:$0xff]
    %v717 = vld [vmem:[%s4 + $0x8] sm:$0xff]
    %v718 = vld [vmem:[%s4 + $0x10] sm:$0xff]
    %v719 = vld [vmem:[%s4 + $0x18] sm:$0xff]
    %v720 = vld [vmem:[%s5] sm:$0xff]
    %v721 = vld [vmem:[%s5 + $0x8] sm:$0xff]
    %v722 = vld [vmem:[%s5 + $0x10] sm:$0xff]
    %v723 = vld [vmem:[%s5 + $0x18] sm:$0xff]
    %v724 = vld [vmem:[%s5 + $0x20] sm:$0xff]
    %v725 = vld [vmem:[%s5 + $0x28] sm:$0xff]
    %v726 = vld [vmem:[%s5 + $0x30] sm:$0xff]
    %v727 = vld [vmem:[%s5 + $0x38] sm:$0xff]
    %v728 = vld [vmem:[%s5 + $0x40] sm:$0xff]
    %v729 = vld [vmem:[%s5 + $0x48] sm:$0xff]
    %v730 = vld [vmem:[%s5 + $0x50] sm:$0xff]
    %v731 = vld [vmem:[%s5 + $0x58] sm:$0xff]
    %v732 = vld [vmem:[%s5 + $0x60] sm:$0xff]
    %v733 = vld [vmem:[%s5 + $0x68] sm:$0xff]
    %v734 = vld [vmem:[%s5 + $0x70] sm:$0xff]
    %v735 = vld [vmem:[%s5 + $0x78] sm:$0xff]
    %736 = vrot.lane.b32.xlu0 %v251, 124
    %v737 = vpop.permute.xlu0 %736
    %738 = vrot.lane.b32.xlu0 %v252, 124
    %v739 = vpop.permute.xlu0 %738
    %740 = vrot.lane.b32.xlu0 %v253, 124
    %v741 = vpop.permute.xlu0 %740
    %742 = vrot.lane.b32.xlu0 %v254, 124
    %v743 = vpop.permute.xlu0 %742
    %v744 = vsub.f32 %v251, %v737
    %v745 = vsub.f32 %v252, %v739
    %v746 = vsub.f32 %v253, %v741
    %v747 = vsub.f32 %v254, %v743
    %v748 = vand.u32 2147483647, %v744
    %v749 = vand.u32 2147483647, %v745
    %v750 = vand.u32 2147483647, %v746
    %v751 = vand.u32 2147483647, %v747
    %752 = vrot.lane.b32.xlu0 %v245, 124
    %v753 = vpop.permute.xlu0 %752
    %754 = vrot.lane.b32.xlu0 %v246, 124
    %v755 = vpop.permute.xlu0 %754
    %756 = vrot.lane.b32.xlu0 %v247, 124
    %v757 = vpop.permute.xlu0 %756
    %758 = vrot.lane.b32.xlu0 %v248, 124
    %v759 = vpop.permute.xlu0 %758
    %v760 = vmul.f32 %v245, %v753
    %v761 = vmul.f32 %v246, %v755
    %v762 = vmul.f32 %v247, %v757
    %v763 = vmul.f32 %v248, %v759
    %v764 = vmul.f32 %v748, %v760
    %v765 = vmul.f32 %v749, %v761
    %v766 = vmul.f32 %v750, %v762
    %v767 = vmul.f32 %v751, %v763
    %784 = vrot.lane.b32.xlu0 %v720, 126
    %v785 = vpop.permute.xlu0 %784
    %786 = vrot.lane.b32.xlu0 %v721, 126
    %v787 = vpop.permute.xlu0 %786
    %788 = vrot.lane.b32.xlu0 %v722, 126
    %v789 = vpop.permute.xlu0 %788
    %790 = vrot.lane.b32.xlu0 %v723, 126
    %v791 = vpop.permute.xlu0 %790
    %792 = vrot.lane.b32.xlu0 %v724, 126
    %v793 = vpop.permute.xlu0 %792
    %794 = vrot.lane.b32.xlu0 %v725, 126
    %v795 = vpop.permute.xlu0 %794
    %796 = vrot.lane.b32.xlu0 %v726, 126
    %v797 = vpop.permute.xlu0 %796
    %798 = vrot.lane.b32.xlu0 %v727, 126
    %v799 = vpop.permute.xlu0 %798
    %800 = vrot.lane.b32.xlu0 %v728, 126
    %v801 = vpop.permute.xlu0 %800
    %802 = vrot.lane.b32.xlu0 %v729, 126
    %v803 = vpop.permute.xlu0 %802
    %804 = vrot.lane.b32.xlu0 %v730, 126
    %v805 = vpop.permute.xlu0 %804
    %806 = vrot.lane.b32.xlu0 %v731, 126
    %v807 = vpop.permute.xlu0 %806
    %808 = vrot.lane.b32.xlu0 %v732, 126
    %v809 = vpop.permute.xlu0 %808
    %810 = vrot.lane.b32.xlu0 %v733, 126
    %v811 = vpop.permute.xlu0 %810
    %812 = vrot.lane.b32.xlu0 %v734, 126
    %v813 = vpop.permute.xlu0 %812
    %814 = vrot.lane.b32.xlu0 %v735, 126
    %v815 = vpop.permute.xlu0 %814
    %832 = vmatprep.subr.mxu0 0.0
    %833 = vmatpush1.msra.mxu0 %v785
    %834 = vmatprep.subr.mxu0 0.0
    %835 = vmatpush1.msra.mxu0 %v787
    %836 = vmatprep.subr.mxu0 0.0
    %837 = vmatpush1.msra.mxu0 %v789
    %838 = vmatprep.subr.mxu0 0.0
    %839 = vmatpush1.msra.mxu0 %v791
    %840 = vmatprep.subr.mxu0 0.0
    %841 = vmatpush1.msra.mxu0 %v793
    %842 = vmatprep.subr.mxu0 0.0
    %843 = vmatpush1.msra.mxu0 %v795
    %844 = vmatprep.subr.mxu0 0.0
    %845 = vmatpush1.msra.mxu0 %v797
    %846 = vmatprep.subr.mxu0 0.0
    %847 = vmatpush1.msra.mxu0 %v799
    %848 = vmatprep.subr.mxu0 0.0
    %849 = vmatpush1.msra.mxu0 %v801
    %850 = vmatprep.subr.mxu0 0.0
    %851 = vmatpush1.msra.mxu0 %v803
    %852 = vmatprep.subr.mxu0 0.0
    %853 = vmatpush1.msra.mxu0 %v805
    %854 = vmatprep.subr.mxu0 0.0
    %855 = vmatpush1.msra.mxu0 %v807
    %856 = vmatprep.subr.mxu0 0.0
    %857 = vmatpush1.msra.mxu0 %v809
    %858 = vmatprep.subr.mxu0 0.0
    %859 = vmatpush1.msra.mxu0 %v811
    %860 = vmatprep.subr.mxu0 0.0
    %861 = vmatpush1.msra.mxu0 %v813
    %862 = vmatprep.subr.mxu0 0.0
    %863 = vmatpush1.msra.mxu0 %v815
    %864 = vmatprep.subr.mxu0 0.0
    %865 = vmatpush1.msra.mxu0 0.0
    %866 = vmatprep.subr.mxu0 0.0
    %867 = vmatpush1.msra.mxu0 0.0
    %868 = vmatprep.subr.mxu0 0.0
    %869 = vmatpush1.msra.mxu0 0.0
    %870 = vmatprep.subr.mxu0 0.0
    %871 = vmatpush1.msra.mxu0 0.0
    %872 = vmatprep.subr.mxu0 0.0
    %873 = vmatpush1.msra.mxu0 0.0
    %874 = vmatprep.subr.mxu0 0.0
    %875 = vmatpush1.msra.mxu0 0.0
    %876 = vmatprep.subr.mxu0 0.0
    %877 = vmatpush1.msra.mxu0 0.0
    %878 = vmatprep.subr.mxu0 0.0
    %879 = vmatpush1.msra.mxu0 0.0
    %880 = vmatprep.subr.mxu0 0.0
    %881 = vmatpush1.msra.mxu0 0.0
    %882 = vmatprep.subr.mxu0 0.0
    %883 = vmatpush1.msra.mxu0 0.0
    %884 = vmatprep.subr.mxu0 0.0
    %885 = vmatpush1.msra.mxu0 0.0
    %886 = vmatprep.subr.mxu0 0.0
    %887 = vmatpush1.msra.mxu0 0.0
    %888 = vmatprep.subr.mxu0 0.0
    %889 = vmatpush1.msra.mxu0 0.0
    %890 = vmatprep.subr.mxu0 0.0
    %891 = vmatpush1.msra.mxu0 0.0
    %892 = vmatprep.subr.mxu0 0.0
    %893 = vmatpush1.msra.mxu0 0.0
    %894 = vmatprep.subr.mxu0 0.0
    %895 = vmatpush1.msra.mxu0 0.0
    %896 = vmatprep.mubr.f32.mxu0 0.0
    %897 = vmatmul.mubr.f32.gmra.mrb[0].mxu0 %v764
    %v898 = vpop.f32.mrb[0].mxu0
    %v899 = vadd.f32 0.0, %v898
    %v900 = vpop.f32.mrb[0].mxu0
    %901 = vmatprep.mubr.f32.mxu0 0.0
    %902 = vmatmul.mubr.f32.gmra.mrb[0].mxu0 %v765
    %v903 = vpop.f32.mrb[0].mxu0
    %v904 = vadd.f32 0.0, %v903
    %v905 = vpop.f32.mrb[0].mxu0
    %906 = vmatprep.mubr.f32.mxu0 0.0
    %907 = vmatmul.mubr.f32.gmra.mrb[0].mxu0 %v766
    %v908 = vpop.f32.mrb[0].mxu0
    %v909 = vadd.f32 0.0, %v908
    %v910 = vpop.f32.mrb[0].mxu0
    %911 = vmatprep.mubr.f32.mxu0 0.0
    %912 = vmatmul.mubr.f32.gmra.mrb[0].mxu0 %v767
    %v913 = vpop.f32.mrb[0].mxu0
    %v914 = vadd.f32 0.0, %v913
    %v915 = vpop.f32.mrb[0].mxu0
    %916 = vdwg.mxu0
    %s917 = sld [smem:[#allocation2 + $0x80]]
    %922 = vrot.lane.b32.xlu0 %v716, 127
    %v923 = vpop.permute.xlu0 %922
    %924 = vrot.lane.b32.xlu0 %v717, 127
    %v925 = vpop.permute.xlu0 %924
    %926 = vrot.lane.b32.xlu0 %v718, 127
    %v927 = vpop.permute.xlu0 %926
    %928 = vrot.lane.b32.xlu0 %v719, 127
    %v929 = vpop.permute.xlu0 %928
    %v934 = vmul.f32 %v899, %v923
    %v935 = vmul.f32 %v904, %v925
    %v936 = vmul.f32 %v909, %v927
    %v937 = vmul.f32 %v914, %v929
    %942 = vrot.lane.b32.xlu0 %v934, 127
    %v943 = vpop.permute.xlu0 %942
    %944 = vrot.lane.b32.xlu0 %v935, 127
    %v945 = vpop.permute.xlu0 %944
    %946 = vrot.lane.b32.xlu0 %v936, 127
    %v947 = vpop.permute.xlu0 %946
    %948 = vrot.lane.b32.xlu0 %v937, 127
    %v949 = vpop.permute.xlu0 %948
    %v954 = vsel %vm431, %v943, 0.0
    %v955 = vsel %vm431, %v945, 0.0
    %v956 = vadd.f32 %v954, %v955
    %v957 = vsel %vm431, %v947, 0.0
    %v958 = vadd.f32 %v956, %v957
    %v959 = vsel %vm431, %v949, 0.0
    %v960 = vadd.f32 %v958, %v959
    %961 = vadd.xlane.f32.xlu0 %v960
    %v962 = vpop.xlane.xlu0 %961
    %v963 = vrot.slane %v962, 4
    %v964 = vadd.f32 %v962, %v963
    %v965 = vrot.slane %v964, 2
    %v966 = vadd.f32 %v964, %v965
    %v967 = vrot.slane %v966, 1
    %v968 = vadd.f32 %v966, %v967
    %s969 = vtos %v968
    %s970 = sadd.f32 %s917, %s969
    %s971 = scalar_lea.smem [#allocation2], 128
    %972 = sst [smem:[%s971]] %s970
    %v973 = vrot.slane %v251, 4
    %v974 = vrot.slane %v252, 4
    %v975 = vrot.slane %v253, 4
    %v976 = vrot.slane %v254, 4
    %v977 = vrot.slane %v255, 4
    %vm978 = vcmp.lt.s32.totalorder %v128, 4
    %v979 = vsel %vm978, %v976, %v977
    %v980 = vsel %vm978, %v975, %v976
    %v981 = vsel %vm978, %v974, %v975
    %v982 = vsel %vm978, %v973, %v974
    %v983 = vsub.f32 %v251, %v982
    %v984 = vsub.f32 %v252, %v981
    %v985 = vsub.f32 %v253, %v980
    %v986 = vsub.f32 %v254, %v979
    %v987 = vand.u32 2147483647, %v983
    %v988 = vand.u32 2147483647, %v984
    %v989 = vand.u32 2147483647, %v985
    %v990 = vand.u32 2147483647, %v986
    %v991 = vrot.slane %v245, 4
    %v992 = vrot.slane %v246, 4
    %v993 = vrot.slane %v247, 4
    %v994 = vrot.slane %v248, 4
    %v995 = vrot.slane %v249, 4
    %v996 = vsel %vm978, %v994, %v995
    %v997 = vsel %vm978, %v993, %v994
    %v998 = vsel %vm978, %v992, %v993
    %v999 = vsel %vm978, %v991, %v992
    %v1000 = vmul.f32 %v245, %v999
    %v1001 = vmul.f32 %v246, %v998
    %v1002 = vmul.f32 %v247, %v997
    %v1003 = vmul.f32 %v248, %v996
    %v1004 = vmul.f32 %v987, %v1000
    %v1005 = vmul.f32 %v988, %v1001
    %v1006 = vmul.f32 %v989, %v1002
    %v1007 = vmul.f32 %v990, %v1003
    %1008 = vmatprep.subr.mxu0 0.0
    %1009 = vmatpush1.msra.mxu0 %v785
    %1010 = vmatprep.subr.mxu0 0.0
    %1011 = vmatpush1.msra.mxu0 %v787
    %1012 = vmatprep.subr.mxu0 0.0
    %1013 = vmatpush1.msra.mxu0 %v789
    %1014 = vmatprep.subr.mxu0 0.0
    %1015 = vmatpush1.msra.mxu0 %v791
    %1016 = vmatprep.subr.mxu0 0.0
    %1017 = vmatpush1.msra.mxu0 %v793
    %1018 = vmatprep.subr.mxu0 0.0
    %1019 = vmatpush1.msra.mxu0 %v795
    %1020 = vmatprep.subr.mxu0 0.0
    %1021 = vmatpush1.msra.mxu0 %v797
    %1022 = vmatprep.subr.mxu0 0.0
    %1023 = vmatpush1.msra.mxu0 %v799
    %1024 = vmatprep.subr.mxu0 0.0
    %1025 = vmatpush1.msra.mxu0 %v801
    %1026 = vmatprep.subr.mxu0 0.0
    %1027 = vmatpush1.msra.mxu0 %v803
    %1028 = vmatprep.subr.mxu0 0.0
    %1029 = vmatpush1.msra.mxu0 %v805
    %1030 = vmatprep.subr.mxu0 0.0
    %1031 = vmatpush1.msra.mxu0 %v807
    %1032 = vmatprep.subr.mxu0 0.0
    %1033 = vmatpush1.msra.mxu0 %v809
    %1034 = vmatprep.subr.mxu0 0.0
    %1035 = vmatpush1.msra.mxu0 %v811
    %1036 = vmatprep.subr.mxu0 0.0
    %1037 = vmatpush1.msra.mxu0 %v813
    %1038 = vmatprep.subr.mxu0 0.0
    %1039 = vmatpush1.msra.mxu0 %v815
    %1040 = vmatprep.subr.mxu0 0.0
    %1041 = vmatpush1.msra.mxu0 0.0
    %1042 = vmatprep.subr.mxu0 0.0
    %1043 = vmatpush1.msra.mxu0 0.0
    %1044 = vmatprep.subr.mxu0 0.0
    %1045 = vmatpush1.msra.mxu0 0.0
    %1046 = vmatprep.subr.mxu0 0.0
    %1047 = vmatpush1.msra.mxu0 0.0
    %1048 = vmatprep.subr.mxu0 0.0
    %1049 = vmatpush1.msra.mxu0 0.0
    %1050 = vmatprep.subr.mxu0 0.0
    %1051 = vmatpush1.msra.mxu0 0.0
    %1052 = vmatprep.subr.mxu0 0.0
    %1053 = vmatpush1.msra.mxu0 0.0
    %1054 = vmatprep.subr.mxu0 0.0
    %1055 = vmatpush1.msra.mxu0 0.0
    %1056 = vmatprep.subr.mxu0 0.0
    %1057 = vmatpush1.msra.mxu0 0.0
    %1058 = vmatprep.subr.mxu0 0.0
    %1059 = vmatpush1.msra.mxu0 0.0
    %1060 = vmatprep.subr.mxu0 0.0
    %1061 = vmatpush1.msra.mxu0 0.0
    %1062 = vmatprep.subr.mxu0 0.0
    %1063 = vmatpush1.msra.mxu0 0.0
    %1064 = vmatprep.subr.mxu0 0.0
    %1065 = vmatpush1.msra.mxu0 0.0
    %1066 = vmatprep.subr.mxu0 0.0
    %1067 = vmatpush1.msra.mxu0 0.0
    %1068 = vmatprep.subr.mxu0 0.0
    %1069 = vmatpush1.msra.mxu0 0.0
    %1070 = vmatprep.subr.mxu0 0.0
    %1071 = vmatpush1.msra.mxu0 0.0
    %1072 = vmatprep.mubr.f32.mxu0 0.0
    %1073 = vmatmul.mubr.f32.gmra.mrb[0].mxu0 %v1004
    %v1074 = vpop.f32.mrb[0].mxu0
    %v1075 = vadd.f32 0.0, %v1074
    %v1076 = vpop.f32.mrb[0].mxu0
    %1077 = vmatprep.mubr.f32.mxu0 0.0
    %1078 = vmatmul.mubr.f32.gmra.mrb[0].mxu0 %v1005
    %v1079 = vpop.f32.mrb[0].mxu0
    %v1080 = vadd.f32 0.0, %v1079
    %v1081 = vpop.f32.mrb[0].mxu0
    %1082 = vmatprep.mubr.f32.mxu0 0.0
    %1083 = vmatmul.mubr.f32.gmra.mrb[0].mxu0 %v1006
    %v1084 = vpop.f32.mrb[0].mxu0
    %v1085 = vadd.f32 0.0, %v1084
    %v1086 = vpop.f32.mrb[0].mxu0
    %1087 = vmatprep.mubr.f32.mxu0 0.0
    %1088 = vmatmul.mubr.f32.gmra.mrb[0].mxu0 %v1007
    %v1089 = vpop.f32.mrb[0].mxu0
    %v1090 = vadd.f32 0.0, %v1089
    %v1091 = vpop.f32.mrb[0].mxu0
    %1092 = vdwg.mxu0
    %s1093 = sld [smem:[#allocation2 + $0x81]]
    %1094 = vrot.lane.b32.xlu0 %v716, 125
    %v1095 = vpop.permute.xlu0 %1094
    %1096 = vrot.lane.b32.xlu0 %v717, 125
    %v1097 = vpop.permute.xlu0 %1096
    %1098 = vrot.lane.b32.xlu0 %v718, 125
    %v1099 = vpop.permute.xlu0 %1098
    %1100 = vrot.lane.b32.xlu0 %v719, 125
    %v1101 = vpop.permute.xlu0 %1100
    %v1106 = vmul.f32 %v1075, %v1095
    %v1107 = vmul.f32 %v1080, %v1097
    %v1108 = vmul.f32 %v1085, %v1099
    %v1109 = vmul.f32 %v1090, %v1101
    %v1110 = vsel %vm431, %v1106, 0.0
    %v1111 = vsel %vm431, %v1107, 0.0
    %v1112 = vadd.f32 %v1110, %v1111
    %v1113 = vsel %vm431, %v1108, 0.0
    %v1114 = vadd.f32 %v1112, %v1113
    %v1115 = vsel %vm431, %v1109, 0.0
    %v1116 = vadd.f32 %v1114, %v1115
    %1117 = vadd.xlane.f32.xlu0 %v1116
    %v1118 = vpop.xlane.xlu0 %1117
    %v1119 = vrot.slane %v1118, 4
    %v1120 = vadd.f32 %v1118, %v1119
    %v1121 = vrot.slane %v1120, 2
    %v1122 = vadd.f32 %v1120, %v1121
    %v1123 = vrot.slane %v1122, 1
    %v1124 = vadd.f32 %v1122, %v1123
    %s1125 = vtos %v1124
    %s1126 = sadd.f32 %s1093, %s1125
    %s1127 = scalar_lea.smem [#allocation2], 129
    %1128 = sst [smem:[%s1127]] %s1126
    %1129 = vmatprep.subr.mxu0 0.0
    %1130 = vmatpush1.msra.mxu0 %v785
    %1131 = vmatprep.subr.mxu0 0.0
    %1132 = vmatpush1.msra.mxu0 %v787
    %1133 = vmatprep.subr.mxu0 0.0
    %1134 = vmatpush1.msra.mxu0 %v789
    %1135 = vmatprep.subr.mxu0 0.0
    %1136 = vmatpush1.msra.mxu0 %v791
    %1137 = vmatprep.subr.mxu0 0.0
    %1138 = vmatpush1.msra.mxu0 %v793
    %1139 = vmatprep.subr.mxu0 0.0
    %1140 = vmatpush1.msra.mxu0 %v795
    %1141 = vmatprep.subr.mxu0 0.0
    %1142 = vmatpush1.msra.mxu0 %v797
    %1143 = vmatprep.subr.mxu0 0.0
    %1144 = vmatpush1.msra.mxu0 %v799
    %1145 = vmatprep.subr.mxu0 0.0
    %1146 = vmatpush1.msra.mxu0 %v801
    %1147 = vmatprep.subr.mxu0 0.0
    %1148 = vmatpush1.msra.mxu0 %v803
    %1149 = vmatprep.subr.mxu0 0.0
    %1150 = vmatpush1.msra.mxu0 %v805
    %1151 = vmatprep.subr.mxu0 0.0
    %1152 = vmatpush1.msra.mxu0 %v807
    %1153 = vmatprep.subr.mxu0 0.0
    %1154 = vmatpush1.msra.mxu0 %v809
    %1155 = vmatprep.subr.mxu0 0.0
    %1156 = vmatpush1.msra.mxu0 %v811
    %1157 = vmatprep.subr.mxu0 0.0
    %1158 = vmatpush1.msra.mxu0 %v813
    %1159 = vmatprep.subr.mxu0 0.0
    %1160 = vmatpush1.msra.mxu0 %v815
    %1161 = vmatprep.subr.mxu0 0.0
    %1162 = vmatpush1.msra.mxu0 0.0
    %1163 = vmatprep.subr.mxu0 0.0
    %1164 = vmatpush1.msra.mxu0 0.0
    %1165 = vmatprep.subr.mxu0 0.0
    %1166 = vmatpush1.msra.mxu0 0.0
    %1167 = vmatprep.subr.mxu0 0.0
    %1168 = vmatpush1.msra.mxu0 0.0
    %1169 = vmatprep.subr.mxu0 0.0
    %1170 = vmatpush1.msra.mxu0 0.0
    %1171 = vmatprep.subr.mxu0 0.0
    %1172 = vmatpush1.msra.mxu0 0.0
    %1173 = vmatprep.subr.mxu0 0.0
    %1174 = vmatpush1.msra.mxu0 0.0
    %1175 = vmatprep.subr.mxu0 0.0
    %1176 = vmatpush1.msra.mxu0 0.0
    %1177 = vmatprep.subr.mxu0 0.0
    %1178 = vmatpush1.msra.mxu0 0.0
    %1179 = vmatprep.subr.mxu0 0.0
    %1180 = vmatpush1.msra.mxu0 0.0
    %1181 = vmatprep.subr.mxu0 0.0
    %1182 = vmatpush1.msra.mxu0 0.0
    %1183 = vmatprep.subr.mxu0 0.0
    %1184 = vmatpush1.msra.mxu0 0.0
    %1185 = vmatprep.subr.mxu0 0.0
    %1186 = vmatpush1.msra.mxu0 0.0
    %1187 = vmatprep.subr.mxu0 0.0
    %1188 = vmatpush1.msra.mxu0 0.0
    %1189 = vmatprep.subr.mxu0 0.0
    %1190 = vmatpush1.msra.mxu0 0.0
    %1191 = vmatprep.subr.mxu0 0.0
    %1192 = vmatpush1.msra.mxu0 0.0
    %1193 = vmatprep.mubr.f32.mxu0 0.0
    %1194 = vmatmul.mubr.f32.gmra.mrb[0].mxu0 %v245
    %v1195 = vpop.f32.mrb[0].mxu0
    %v1196 = vadd.f32 0.0, %v1195
    %v1197 = vpop.f32.mrb[0].mxu0
    %1198 = vmatprep.mubr.f32.mxu0 0.0
    %1199 = vmatmul.mubr.f32.gmra.mrb[0].mxu0 %v246
    %v1200 = vpop.f32.mrb[0].mxu0
    %v1201 = vadd.f32 0.0, %v1200
    %v1202 = vpop.f32.mrb[0].mxu0
    %1203 = vmatprep.mubr.f32.mxu0 0.0
    %1204 = vmatmul.mubr.f32.gmra.mrb[0].mxu0 %v247
    %v1205 = vpop.f32.mrb[0].mxu0
    %v1206 = vadd.f32 0.0, %v1205
    %v1207 = vpop.f32.mrb[0].mxu0
    %1208 = vmatprep.mubr.f32.mxu0 0.0
    %1209 = vmatmul.mubr.f32.gmra.mrb[0].mxu0 %v248
    %v1210 = vpop.f32.mrb[0].mxu0
    %v1211 = vadd.f32 0.0, %v1210
    %v1212 = vpop.f32.mrb[0].mxu0
    %1213 = vdwg.mxu0
    %s1214 = sld [smem:[#allocation2 + $0x82]]
    %1215 = vrot.lane.b32.xlu0 %v716, 126
    %v1216 = vpop.permute.xlu0 %1215
    %1217 = vrot.lane.b32.xlu0 %v717, 126
    %v1218 = vpop.permute.xlu0 %1217
    %1219 = vrot.lane.b32.xlu0 %v718, 126
    %v1220 = vpop.permute.xlu0 %1219
    %1221 = vrot.lane.b32.xlu0 %v719, 126
    %v1222 = vpop.permute.xlu0 %1221
    %v1227 = vmul.f32 %v1196, %v1216
    %v1228 = vmul.f32 %v1201, %v1218
    %v1229 = vmul.f32 %v1206, %v1220
    %v1230 = vmul.f32 %v1211, %v1222
    %v1231 = vsel %vm431, %v1227, 0.0
    %v1232 = vsel %vm431, %v1228, 0.0
    %v1233 = vadd.f32 %v1231, %v1232
    %v1234 = vsel %vm431, %v1229, 0.0
    %v1235 = vadd.f32 %v1233, %v1234
    %v1236 = vsel %vm431, %v1230, 0.0
    %v1237 = vadd.f32 %v1235, %v1236
    %1238 = vadd.xlane.f32.xlu0 %v1237
    %v1239 = vpop.xlane.xlu0 %1238
    %v1240 = vrot.slane %v1239, 4
    %v1241 = vadd.f32 %v1239, %v1240
    %v1242 = vrot.slane %v1241, 2
    %v1243 = vadd.f32 %v1241, %v1242
    %v1244 = vrot.slane %v1243, 1
    %v1245 = vadd.f32 %v1243, %v1244
    %s1246 = vtos %v1245
    %s1247 = sadd.f32 %s1214, %s1246
    %s1248 = scalar_lea.smem [#allocation2], 130
    %1249 = sst [smem:[%s1248]] %s1247
    %v1250 = vld [vmem:[%s4] sm:$0xff]
    %v1251 = vld [vmem:[%s4 + $0x8] sm:$0xff]
    %v1252 = vld [vmem:[%s4 + $0x10] sm:$0xff]
    %v1253 = vld [vmem:[%s4 + $0x18] sm:$0xff]
    %v1254 = vld [vmem:[%s5] sm:$0xff]
    %v1255 = vld [vmem:[%s5 + $0x8] sm:$0xff]
    %v1256 = vld [vmem:[%s5 + $0x10] sm:$0xff]
    %v1257 = vld [vmem:[%s5 + $0x18] sm:$0xff]
    %v1258 = vld [vmem:[%s5 + $0x20] sm:$0xff]
    %v1259 = vld [vmem:[%s5 + $0x28] sm:$0xff]
    %v1260 = vld [vmem:[%s5 + $0x30] sm:$0xff]
    %v1261 = vld [vmem:[%s5 + $0x38] sm:$0xff]
    %v1262 = vld [vmem:[%s5 + $0x40] sm:$0xff]
    %v1263 = vld [vmem:[%s5 + $0x48] sm:$0xff]
    %v1264 = vld [vmem:[%s5 + $0x50] sm:$0xff]
    %v1265 = vld [vmem:[%s5 + $0x58] sm:$0xff]
    %v1266 = vld [vmem:[%s5 + $0x60] sm:$0xff]
    %v1267 = vld [vmem:[%s5 + $0x68] sm:$0xff]
    %v1268 = vld [vmem:[%s5 + $0x70] sm:$0xff]
    %v1269 = vld [vmem:[%s5 + $0x78] sm:$0xff]
    %1270 = vrot.lane.b32.xlu0 %v251, 120
    %v1271 = vpop.permute.xlu0 %1270
    %1272 = vrot.lane.b32.xlu0 %v252, 120
    %v1273 = vpop.permute.xlu0 %1272
    %1274 = vrot.lane.b32.xlu0 %v253, 120
    %v1275 = vpop.permute.xlu0 %1274
    %1276 = vrot.lane.b32.xlu0 %v254, 120
    %v1277 = vpop.permute.xlu0 %1276
    %v1278 = vsub.f32 %v251, %v1271
    %v1279 = vsub.f32 %v252, %v1273
    %v1280 = vsub.f32 %v253, %v1275
    %v1281 = vsub.f32 %v254, %v1277
    %v1282 = vand.u32 2147483647, %v1278
    %v1283 = vand.u32 2147483647, %v1279
    %v1284 = vand.u32 2147483647, %v1280
    %v1285 = vand.u32 2147483647, %v1281
    %1286 = vrot.lane.b32.xlu0 %v245, 120
    %v1287 = vpop.permute.xlu0 %1286
    %1288 = vrot.lane.b32.xlu0 %v246, 120
    %v1289 = vpop.permute.xlu0 %1288
    %1290 = vrot.lane.b32.xlu0 %v247, 120
    %v1291 = vpop.permute.xlu0 %1290
    %1292 = vrot.lane.b32.xlu0 %v248, 120
    %v1293 = vpop.permute.xlu0 %1292
    %v1294 = vmul.f32 %v245, %v1287
    %v1295 = vmul.f32 %v246, %v1289
    %v1296 = vmul.f32 %v247, %v1291
    %v1297 = vmul.f32 %v248, %v1293
    %v1298 = vmul.f32 %v1282, %v1294
    %v1299 = vmul.f32 %v1283, %v1295
    %v1300 = vmul.f32 %v1284, %v1296
    %v1301 = vmul.f32 %v1285, %v1297
    %1318 = vrot.lane.b32.xlu0 %v1254, 124
    %v1319 = vpop.permute.xlu0 %1318
    %1320 = vrot.lane.b32.xlu0 %v1255, 124
    %v1321 = vpop.permute.xlu0 %1320
    %1322 = vrot.lane.b32.xlu0 %v1256, 124
    %v1323 = vpop.permute.xlu0 %1322
    %1324 = vrot.lane.b32.xlu0 %v1257, 124
    %v1325 = vpop.permute.xlu0 %1324
    %1326 = vrot.lane.b32.xlu0 %v1258, 124
    %v1327 = vpop.permute.xlu0 %1326
    %1328 = vrot.lane.b32.xlu0 %v1259, 124
    %v1329 = vpop.permute.xlu0 %1328
    %1330 = vrot.lane.b32.xlu0 %v1260, 124
    %v1331 = vpop.permute.xlu0 %1330
    %1332 = vrot.lane.b32.xlu0 %v1261, 124
    %v1333 = vpop.permute.xlu0 %1332
    %1334 = vrot.lane.b32.xlu0 %v1262, 124
    %v1335 = vpop.permute.xlu0 %1334
    %1336 = vrot.lane.b32.xlu0 %v1263, 124
    %v1337 = vpop.permute.xlu0 %1336
    %1338 = vrot.lane.b32.xlu0 %v1264, 124
    %v1339 = vpop.permute.xlu0 %1338
    %1340 = vrot.lane.b32.xlu0 %v1265, 124
    %v1341 = vpop.permute.xlu0 %1340
    %1342 = vrot.lane.b32.xlu0 %v1266, 124
    %v1343 = vpop.permute.xlu0 %1342
    %1344 = vrot.lane.b32.xlu0 %v1267, 124
    %v1345 = vpop.permute.xlu0 %1344
    %1346 = vrot.lane.b32.xlu0 %v1268, 124
    %v1347 = vpop.permute.xlu0 %1346
    %1348 = vrot.lane.b32.xlu0 %v1269, 124
    %v1349 = vpop.permute.xlu0 %1348
    %1366 = vmatprep.subr.mxu0 0.0
    %1367 = vmatpush1.msra.mxu0 %v1319
    %1368 = vmatprep.subr.mxu0 0.0
    %1369 = vmatpush1.msra.mxu0 %v1321
    %1370 = vmatprep.subr.mxu0 0.0
    %1371 = vmatpush1.msra.mxu0 %v1323
    %1372 = vmatprep.subr.mxu0 0.0
    %1373 = vmatpush1.msra.mxu0 %v1325
    %1374 = vmatprep.subr.mxu0 0.0
    %1375 = vmatpush1.msra.mxu0 %v1327
    %1376 = vmatprep.subr.mxu0 0.0
    %1377 = vmatpush1.msra.mxu0 %v1329
    %1378 = vmatprep.subr.mxu0 0.0
    %1379 = vmatpush1.msra.mxu0 %v1331
    %1380 = vmatprep.subr.mxu0 0.0
    %1381 = vmatpush1.msra.mxu0 %v1333
    %1382 = vmatprep.subr.mxu0 0.0
    %1383 = vmatpush1.msra.mxu0 %v1335
    %1384 = vmatprep.subr.mxu0 0.0
    %1385 = vmatpush1.msra.mxu0 %v1337
    %1386 = vmatprep.subr.mxu0 0.0
    %1387 = vmatpush1.msra.mxu0 %v1339
    %1388 = vmatprep.subr.mxu0 0.0
    %1389 = vmatpush1.msra.mxu0 %v1341
    %1390 = vmatprep.subr.mxu0 0.0
    %1391 = vmatpush1.msra.mxu0 %v1343
    %1392 = vmatprep.subr.mxu0 0.0
    %1393 = vmatpush1.msra.mxu0 %v1345
    %1394 = vmatprep.subr.mxu0 0.0
    %1395 = vmatpush1.msra.mxu0 %v1347
    %1396 = vmatprep.subr.mxu0 0.0
    %1397 = vmatpush1.msra.mxu0 %v1349
    %1398 = vmatprep.subr.mxu0 0.0
    %1399 = vmatpush1.msra.mxu0 0.0
    %1400 = vmatprep.subr.mxu0 0.0
    %1401 = vmatpush1.msra.mxu0 0.0
    %1402 = vmatprep.subr.mxu0 0.0
    %1403 = vmatpush1.msra.mxu0 0.0
    %1404 = vmatprep.subr.mxu0 0.0
    %1405 = vmatpush1.msra.mxu0 0.0
    %1406 = vmatprep.subr.mxu0 0.0
    %1407 = vmatpush1.msra.mxu0 0.0
    %1408 = vmatprep.subr.mxu0 0.0
    %1409 = vmatpush1.msra.mxu0 0.0
    %1410 = vmatprep.subr.mxu0 0.0
    %1411 = vmatpush1.msra.mxu0 0.0
    %1412 = vmatprep.subr.mxu0 0.0
    %1413 = vmatpush1.msra.mxu0 0.0
    %1414 = vmatprep.subr.mxu0 0.0
    %1415 = vmatpush1.msra.mxu0 0.0
    %1416 = vmatprep.subr.mxu0 0.0
    %1417 = vmatpush1.msra.mxu0 0.0
    %1418 = vmatprep.subr.mxu0 0.0
    %1419 = vmatpush1.msra.mxu0 0.0
    %1420 = vmatprep.subr.mxu0 0.0
    %1421 = vmatpush1.msra.mxu0 0.0
    %1422 = vmatprep.subr.mxu0 0.0
    %1423 = vmatpush1.msra.mxu0 0.0
    %1424 = vmatprep.subr.mxu0 0.0
    %1425 = vmatpush1.msra.mxu0 0.0
    %1426 = vmatprep.subr.mxu0 0.0
    %1427 = vmatpush1.msra.mxu0 0.0
    %1428 = vmatprep.subr.mxu0 0.0
    %1429 = vmatpush1.msra.mxu0 0.0
    %1430 = vmatprep.mubr.f32.mxu0 0.0
    %1431 = vmatmul.mubr.f32.gmra.mrb[0].mxu0 %v1298
    %v1432 = vpop.f32.mrb[0].mxu0
    %v1433 = vadd.f32 0.0, %v1432
    %v1434 = vpop.f32.mrb[0].mxu0
    %1435 = vmatprep.mubr.f32.mxu0 0.0
    %1436 = vmatmul.mubr.f32.gmra.mrb[0].mxu0 %v1299
    %v1437 = vpop.f32.mrb[0].mxu0
    %v1438 = vadd.f32 0.0, %v1437
    %v1439 = vpop.f32.mrb[0].mxu0
    %1440 = vmatprep.mubr.f32.mxu0 0.0
    %1441 = vmatmul.mubr.f32.gmra.mrb[0].mxu0 %v1300
    %v1442 = vpop.f32.mrb[0].mxu0
    %v1443 = vadd.f32 0.0, %v1442
    %v1444 = vpop.f32.mrb[0].mxu0
    %1445 = vmatprep.mubr.f32.mxu0 0.0
    %1446 = vmatmul.mubr.f32.gmra.mrb[0].mxu0 %v1301
    %v1447 = vpop.f32.mrb[0].mxu0
    %v1448 = vadd.f32 0.0, %v1447
    %v1449 = vpop.f32.mrb[0].mxu0
    %1450 = vdwg.mxu0
    %s1451 = sld [smem:[#allocation2 + $0x100]]
    %1456 = vrot.lane.b32.xlu0 %v1250, 125
    %v1457 = vpop.permute.xlu0 %1456
    %1458 = vrot.lane.b32.xlu0 %v1251, 125
    %v1459 = vpop.permute.xlu0 %1458
    %1460 = vrot.lane.b32.xlu0 %v1252, 125
    %v1461 = vpop.permute.xlu0 %1460
    %1462 = vrot.lane.b32.xlu0 %v1253, 125
    %v1463 = vpop.permute.xlu0 %1462
    %v1468 = vmul.f32 %v1433, %v1457
    %v1469 = vmul.f32 %v1438, %v1459
    %v1470 = vmul.f32 %v1443, %v1461
    %v1471 = vmul.f32 %v1448, %v1463
    %1476 = vrot.lane.b32.xlu0 %v1468, 127
    %v1477 = vpop.permute.xlu0 %1476
    %1478 = vrot.lane.b32.xlu0 %v1469, 127
    %v1479 = vpop.permute.xlu0 %1478
    %1480 = vrot.lane.b32.xlu0 %v1470, 127
    %v1481 = vpop.permute.xlu0 %1480
    %1482 = vrot.lane.b32.xlu0 %v1471, 127
    %v1483 = vpop.permute.xlu0 %1482
    %v1488 = vsel %vm431, %v1477, 0.0
    %v1489 = vsel %vm431, %v1479, 0.0
    %v1490 = vadd.f32 %v1488, %v1489
    %v1491 = vsel %vm431, %v1481, 0.0
    %v1492 = vadd.f32 %v1490, %v1491
    %v1493 = vsel %vm431, %v1483, 0.0
    %v1494 = vadd.f32 %v1492, %v1493
    %1495 = vadd.xlane.f32.xlu0 %v1494
    %v1496 = vpop.xlane.xlu0 %1495
    %v1497 = vrot.slane %v1496, 4
    %v1498 = vadd.f32 %v1496, %v1497
    %v1499 = vrot.slane %v1498, 2
    %v1500 = vadd.f32 %v1498, %v1499
    %v1501 = vrot.slane %v1500, 1
    %v1502 = vadd.f32 %v1500, %v1501
    %s1503 = vtos %v1502
    %s1504 = sadd.f32 %s1451, %s1503
    %s1505 = scalar_lea.smem [#allocation2], 256
    %1506 = sst [smem:[%s1505]] %s1504
    %v1507 = vsub.f32 %v251, %v252
    %v1508 = vsub.f32 %v252, %v253
    %v1509 = vsub.f32 %v253, %v254
    %v1510 = vsub.f32 %v254, %v255
    %v1511 = vand.u32 2147483647, %v1507
    %v1512 = vand.u32 2147483647, %v1508
    %v1513 = vand.u32 2147483647, %v1509
    %v1514 = vand.u32 2147483647, %v1510
    %v1515 = vmul.f32 %v245, %v246
    %v1516 = vmul.f32 %v246, %v247
    %v1517 = vmul.f32 %v247, %v248
    %v1518 = vmul.f32 %v248, %v249
    %v1519 = vmul.f32 %v1511, %v1515
    %v1520 = vmul.f32 %v1512, %v1516
    %v1521 = vmul.f32 %v1513, %v1517
    %v1522 = vmul.f32 %v1514, %v1518
    %1523 = vmatprep.subr.mxu0 0.0
    %1524 = vmatpush1.msra.mxu0 %v1319
    %1525 = vmatprep.subr.mxu0 0.0
    %1526 = vmatpush1.msra.mxu0 %v1321
    %1527 = vmatprep.subr.mxu0 0.0
    %1528 = vmatpush1.msra.mxu0 %v1323
    %1529 = vmatprep.subr.mxu0 0.0
    %1530 = vmatpush1.msra.mxu0 %v1325
    %1531 = vmatprep.subr.mxu0 0.0
    %1532 = vmatpush1.msra.mxu0 %v1327
    %1533 = vmatprep.subr.mxu0 0.0
    %1534 = vmatpush1.msra.mxu0 %v1329
    %1535 = vmatprep.subr.mxu0 0.0
    %1536 = vmatpush1.msra.mxu0 %v1331
    %1537 = vmatprep.subr.mxu0 0.0
    %1538 = vmatpush1.msra.mxu0 %v1333
    %1539 = vmatprep.subr.mxu0 0.0
    %1540 = vmatpush1.msra.mxu0 %v1335
    %1541 = vmatprep.subr.mxu0 0.0
    %1542 = vmatpush1.msra.mxu0 %v1337
    %1543 = vmatprep.subr.mxu0 0.0
    %1544 = vmatpush1.msra.mxu0 %v1339
    %1545 = vmatprep.subr.mxu0 0.0
    %1546 = vmatpush1.msra.mxu0 %v1341
    %1547 = vmatprep.subr.mxu0 0.0
    %1548 = vmatpush1.msra.mxu0 %v1343
    %1549 = vmatprep.subr.mxu0 0.0
    %1550 = vmatpush1.msra.mxu0 %v1345
    %1551 = vmatprep.subr.mxu0 0.0
    %1552 = vmatpush1.msra.mxu0 %v1347
    %1553 = vmatprep.subr.mxu0 0.0
    %1554 = vmatpush1.msra.mxu0 %v1349
    %1555 = vmatprep.subr.mxu0 0.0
    %1556 = vmatpush1.msra.mxu0 0.0
    %1557 = vmatprep.subr.mxu0 0.0
    %1558 = vmatpush1.msra.mxu0 0.0
    %1559 = vmatprep.subr.mxu0 0.0
    %1560 = vmatpush1.msra.mxu0 0.0
    %1561 = vmatprep.subr.mxu0 0.0
    %1562 = vmatpush1.msra.mxu0 0.0
    %1563 = vmatprep.subr.mxu0 0.0
    %1564 = vmatpush1.msra.mxu0 0.0
    %1565 = vmatprep.subr.mxu0 0.0
    %1566 = vmatpush1.msra.mxu0 0.0
    %1567 = vmatprep.subr.mxu0 0.0
    %1568 = vmatpush1.msra.mxu0 0.0
    %1569 = vmatprep.subr.mxu0 0.0
    %1570 = vmatpush1.msra.mxu0 0.0
    %1571 = vmatprep.subr.mxu0 0.0
    %1572 = vmatpush1.msra.mxu0 0.0
    %1573 = vmatprep.subr.mxu0 0.0
    %1574 = vmatpush1.msra.mxu0 0.0
    %1575 = vmatprep.subr.mxu0 0.0
    %1576 = vmatpush1.msra.mxu0 0.0
    %1577 = vmatprep.subr.mxu0 0.0
    %1578 = vmatpush1.msra.mxu0 0.0
    %1579 = vmatprep.subr.mxu0 0.0
    %1580 = vmatpush1.msra.mxu0 0.0
    %1581 = vmatprep.subr.mxu0 0.0
    %1582 = vmatpush1.msra.mxu0 0.0
    %1583 = vmatprep.subr.mxu0 0.0
    %1584 = vmatpush1.msra.mxu0 0.0
    %1585 = vmatprep.subr.mxu0 0.0
    %1586 = vmatpush1.msra.mxu0 0.0
    %1587 = vmatprep.mubr.f32.mxu0 0.0
    %1588 = vmatmul.mubr.f32.gmra.mrb[0].mxu0 %v1519
    %v1589 = vpop.f32.mrb[0].mxu0
    %v1590 = vadd.f32 0.0, %v1589
    %v1591 = vpop.f32.mrb[0].mxu0
    %1592 = vmatprep.mubr.f32.mxu0 0.0
    %1593 = vmatmul.mubr.f32.gmra.mrb[0].mxu0 %v1520
    %v1594 = vpop.f32.mrb[0].mxu0
    %v1595 = vadd.f32 0.0, %v1594
    %v1596 = vpop.f32.mrb[0].mxu0
    %1597 = vmatprep.mubr.f32.mxu0 0.0
    %1598 = vmatmul.mubr.f32.gmra.mrb[0].mxu0 %v1521
    %v1599 = vpop.f32.mrb[0].mxu0
    %v1600 = vadd.f32 0.0, %v1599
    %v1601 = vpop.f32.mrb[0].mxu0
    %1602 = vmatprep.mubr.f32.mxu0 0.0
    %1603 = vmatmul.mubr.f32.gmra.mrb[0].mxu0 %v1522
    %v1604 = vpop.f32.mrb[0].mxu0
    %v1605 = vadd.f32 0.0, %v1604
    %v1606 = vpop.f32.mrb[0].mxu0
    %1607 = vdwg.mxu0
    %s1608 = sld [smem:[#allocation2 + $0x101]]
    %1609 = vrot.lane.b32.xlu0 %v1250, 123
    %v1610 = vpop.permute.xlu0 %1609
    %1611 = vrot.lane.b32.xlu0 %v1251, 123
    %v1612 = vpop.permute.xlu0 %1611
    %1613 = vrot.lane.b32.xlu0 %v1252, 123
    %v1614 = vpop.permute.xlu0 %1613
    %1615 = vrot.lane.b32.xlu0 %v1253, 123
    %v1616 = vpop.permute.xlu0 %1615
    %v1621 = vmul.f32 %v1590, %v1610
    %v1622 = vmul.f32 %v1595, %v1612
    %v1623 = vmul.f32 %v1600, %v1614
    %v1624 = vmul.f32 %v1605, %v1616
    %v1625 = vsel %vm431, %v1621, 0.0
    %v1626 = vsel %vm431, %v1622, 0.0
    %v1627 = vadd.f32 %v1625, %v1626
    %v1628 = vsel %vm431, %v1623, 0.0
    %v1629 = vadd.f32 %v1627, %v1628
    %v1630 = vsel %vm431, %v1624, 0.0
    %v1631 = vadd.f32 %v1629, %v1630
    %1632 = vadd.xlane.f32.xlu0 %v1631
    %v1633 = vpop.xlane.xlu0 %1632
    %v1634 = vrot.slane %v1633, 4
    %v1635 = vadd.f32 %v1633, %v1634
    %v1636 = vrot.slane %v1635, 2
    %v1637 = vadd.f32 %v1635, %v1636
    %v1638 = vrot.slane %v1637, 1
    %v1639 = vadd.f32 %v1637, %v1638
    %s1640 = vtos %v1639
    %s1641 = sadd.f32 %s1608, %s1640
    %s1642 = scalar_lea.smem [#allocation2], 257
    %1643 = sst [smem:[%s1642]] %s1641
    %1644 = vmatprep.subr.mxu0 0.0
    %1645 = vmatpush1.msra.mxu0 %v1319
    %1646 = vmatprep.subr.mxu0 0.0
    %1647 = vmatpush1.msra.mxu0 %v1321
    %1648 = vmatprep.subr.mxu0 0.0
    %1649 = vmatpush1.msra.mxu0 %v1323
    %1650 = vmatprep.subr.mxu0 0.0
    %1651 = vmatpush1.msra.mxu0 %v1325
    %1652 = vmatprep.subr.mxu0 0.0
    %1653 = vmatpush1.msra.mxu0 %v1327
    %1654 = vmatprep.subr.mxu0 0.0
    %1655 = vmatpush1.msra.mxu0 %v1329
    %1656 = vmatprep.subr.mxu0 0.0
    %1657 = vmatpush1.msra.mxu0 %v1331
    %1658 = vmatprep.subr.mxu0 0.0
    %1659 = vmatpush1.msra.mxu0 %v1333
    %1660 = vmatprep.subr.mxu0 0.0
    %1661 = vmatpush1.msra.mxu0 %v1335
    %1662 = vmatprep.subr.mxu0 0.0
    %1663 = vmatpush1.msra.mxu0 %v1337
    %1664 = vmatprep.subr.mxu0 0.0
    %1665 = vmatpush1.msra.mxu0 %v1339
    %1666 = vmatprep.subr.mxu0 0.0
    %1667 = vmatpush1.msra.mxu0 %v1341
    %1668 = vmatprep.subr.mxu0 0.0
    %1669 = vmatpush1.msra.mxu0 %v1343
    %1670 = vmatprep.subr.mxu0 0.0
    %1671 = vmatpush1.msra.mxu0 %v1345
    %1672 = vmatprep.subr.mxu0 0.0
    %1673 = vmatpush1.msra.mxu0 %v1347
    %1674 = vmatprep.subr.mxu0 0.0
    %1675 = vmatpush1.msra.mxu0 %v1349
    %1676 = vmatprep.subr.mxu0 0.0
    %1677 = vmatpush1.msra.mxu0 0.0
    %1678 = vmatprep.subr.mxu0 0.0
    %1679 = vmatpush1.msra.mxu0 0.0
    %1680 = vmatprep.subr.mxu0 0.0
    %1681 = vmatpush1.msra.mxu0 0.0
    %1682 = vmatprep.subr.mxu0 0.0
    %1683 = vmatpush1.msra.mxu0 0.0
    %1684 = vmatprep.subr.mxu0 0.0
    %1685 = vmatpush1.msra.mxu0 0.0
    %1686 = vmatprep.subr.mxu0 0.0
    %1687 = vmatpush1.msra.mxu0 0.0
    %1688 = vmatprep.subr.mxu0 0.0
    %1689 = vmatpush1.msra.mxu0 0.0
    %1690 = vmatprep.subr.mxu0 0.0
    %1691 = vmatpush1.msra.mxu0 0.0
    %1692 = vmatprep.subr.mxu0 0.0
    %1693 = vmatpush1.msra.mxu0 0.0
    %1694 = vmatprep.subr.mxu0 0.0
    %1695 = vmatpush1.msra.mxu0 0.0
    %1696 = vmatprep.subr.mxu0 0.0
    %1697 = vmatpush1.msra.mxu0 0.0
    %1698 = vmatprep.subr.mxu0 0.0
    %1699 = vmatpush1.msra.mxu0 0.0
    %1700 = vmatprep.subr.mxu0 0.0
    %1701 = vmatpush1.msra.mxu0 0.0
    %1702 = vmatprep.subr.mxu0 0.0
    %1703 = vmatpush1.msra.mxu0 0.0
    %1704 = vmatprep.subr.mxu0 0.0
    %1705 = vmatpush1.msra.mxu0 0.0
    %1706 = vmatprep.subr.mxu0 0.0
    %1707 = vmatpush1.msra.mxu0 0.0
    %1708 = vmatprep.mubr.f32.mxu0 0.0
    %1709 = vmatmul.mubr.f32.gmra.mrb[0].mxu0 %v245
    %v1710 = vpop.f32.mrb[0].mxu0
    %v1711 = vadd.f32 0.0, %v1710
    %v1712 = vpop.f32.mrb[0].mxu0
    %1713 = vmatprep.mubr.f32.mxu0 0.0
    %1714 = vmatmul.mubr.f32.gmra.mrb[0].mxu0 %v246
    %v1715 = vpop.f32.mrb[0].mxu0
    %v1716 = vadd.f32 0.0, %v1715
    %v1717 = vpop.f32.mrb[0].mxu0
    %1718 = vmatprep.mubr.f32.mxu0 0.0
    %1719 = vmatmul.mubr.f32.gmra.mrb[0].mxu0 %v247
    %v1720 = vpop.f32.mrb[0].mxu0
    %v1721 = vadd.f32 0.0, %v1720
    %v1722 = vpop.f32.mrb[0].mxu0
    %1723 = vmatprep.mubr.f32.mxu0 0.0
    %1724 = vmatmul.mubr.f32.gmra.mrb[0].mxu0 %v248
    %v1725 = vpop.f32.mrb[0].mxu0
    %v1726 = vadd.f32 0.0, %v1725
    %v1727 = vpop.f32.mrb[0].mxu0
    %1728 = vdwg.mxu0
    %s1729 = sld [smem:[#allocation2 + $0x102]]
    %1730 = vrot.lane.b32.xlu0 %v1250, 124
    %v1731 = vpop.permute.xlu0 %1730
    %1732 = vrot.lane.b32.xlu0 %v1251, 124
    %v1733 = vpop.permute.xlu0 %1732
    %1734 = vrot.lane.b32.xlu0 %v1252, 124
    %v1735 = vpop.permute.xlu0 %1734
    %1736 = vrot.lane.b32.xlu0 %v1253, 124
    %v1737 = vpop.permute.xlu0 %1736
    %v1742 = vmul.f32 %v1711, %v1731
    %v1743 = vmul.f32 %v1716, %v1733
    %v1744 = vmul.f32 %v1721, %v1735
    %v1745 = vmul.f32 %v1726, %v1737
    %v1746 = vsel %vm431, %v1742, 0.0
    %v1747 = vsel %vm431, %v1743, 0.0
    %v1748 = vadd.f32 %v1746, %v1747
    %v1749 = vsel %vm431, %v1744, 0.0
    %v1750 = vadd.f32 %v1748, %v1749
    %v1751 = vsel %vm431, %v1745, 0.0
    %v1752 = vadd.f32 %v1750, %v1751
    %1753 = vadd.xlane.f32.xlu0 %v1752
    %v1754 = vpop.xlane.xlu0 %1753
    %v1755 = vrot.slane %v1754, 4
    %v1756 = vadd.f32 %v1754, %v1755
    %v1757 = vrot.slane %v1756, 2
    %v1758 = vadd.f32 %v1756, %v1757
    %v1759 = vrot.slane %v1758, 1
    %v1760 = vadd.f32 %v1758, %v1759
    %s1761 = vtos %v1760
    %s1762 = sadd.f32 %s1729, %s1761
    %s1763 = scalar_lea.smem [#allocation2], 258
    %1764 = sst [smem:[%s1763]] %s1762
    %v1765 = vld [vmem:[%s4] sm:$0xff]
    %v1766 = vld [vmem:[%s4 + $0x8] sm:$0xff]
    %v1767 = vld [vmem:[%s4 + $0x10] sm:$0xff]
    %v1768 = vld [vmem:[%s4 + $0x18] sm:$0xff]
    %v1769 = vld [vmem:[%s5] sm:$0xff]
    %v1770 = vld [vmem:[%s5 + $0x8] sm:$0xff]
    %v1771 = vld [vmem:[%s5 + $0x10] sm:$0xff]
    %v1772 = vld [vmem:[%s5 + $0x18] sm:$0xff]
    %v1773 = vld [vmem:[%s5 + $0x20] sm:$0xff]
    %v1774 = vld [vmem:[%s5 + $0x28] sm:$0xff]
    %v1775 = vld [vmem:[%s5 + $0x30] sm:$0xff]
    %v1776 = vld [vmem:[%s5 + $0x38] sm:$0xff]
    %v1777 = vld [vmem:[%s5 + $0x40] sm:$0xff]
    %v1778 = vld [vmem:[%s5 + $0x48] sm:$0xff]
    %v1779 = vld [vmem:[%s5 + $0x50] sm:$0xff]
    %v1780 = vld [vmem:[%s5 + $0x58] sm:$0xff]
    %v1781 = vld [vmem:[%s5 + $0x60] sm:$0xff]
    %v1782 = vld [vmem:[%s5 + $0x68] sm:$0xff]
    %v1783 = vld [vmem:[%s5 + $0x70] sm:$0xff]
    %v1784 = vld [vmem:[%s5 + $0x78] sm:$0xff]
    %1785 = vrot.lane.b32.xlu0 %v251, 116
    %v1786 = vpop.permute.xlu0 %1785
    %1787 = vrot.lane.b32.xlu0 %v252, 116
    %v1788 = vpop.permute.xlu0 %1787
    %1789 = vrot.lane.b32.xlu0 %v253, 116
    %v1790 = vpop.permute.xlu0 %1789
    %1791 = vrot.lane.b32.xlu0 %v254, 116
    %v1792 = vpop.permute.xlu0 %1791
    %v1793 = vsub.f32 %v251, %v1786
    %v1794 = vsub.f32 %v252, %v1788
    %v1795 = vsub.f32 %v253, %v1790
    %v1796 = vsub.f32 %v254, %v1792
    %v1797 = vand.u32 2147483647, %v1793
    %v1798 = vand.u32 2147483647, %v1794
    %v1799 = vand.u32 2147483647, %v1795
    %v1800 = vand.u32 2147483647, %v1796
    %1801 = vrot.lane.b32.xlu0 %v245, 116
    %v1802 = vpop.permute.xlu0 %1801
    %1803 = vrot.lane.b32.xlu0 %v246, 116
    %v1804 = vpop.permute.xlu0 %1803
    %1805 = vrot.lane.b32.xlu0 %v247, 116
    %v1806 = vpop.permute.xlu0 %1805
    %1807 = vrot.lane.b32.xlu0 %v248, 116
    %v1808 = vpop.permute.xlu0 %1807
    %v1809 = vmul.f32 %v245, %v1802
    %v1810 = vmul.f32 %v246, %v1804
    %v1811 = vmul.f32 %v247, %v1806
    %v1812 = vmul.f32 %v248, %v1808
    %v1813 = vmul.f32 %v1797, %v1809
    %v1814 = vmul.f32 %v1798, %v1810
    %v1815 = vmul.f32 %v1799, %v1811
    %v1816 = vmul.f32 %v1800, %v1812
    %1833 = vrot.lane.b32.xlu0 %v1769, 122
    %v1834 = vpop.permute.xlu0 %1833
    %1835 = vrot.lane.b32.xlu0 %v1770, 122
    %v1836 = vpop.permute.xlu0 %1835
    %1837 = vrot.lane.b32.xlu0 %v1771, 122
    %v1838 = vpop.permute.xlu0 %1837
    %1839 = vrot.lane.b32.xlu0 %v1772, 122
    %v1840 = vpop.permute.xlu0 %1839
    %1841 = vrot.lane.b32.xlu0 %v1773, 122
    %v1842 = vpop.permute.xlu0 %1841
    %1843 = vrot.lane.b32.xlu0 %v1774, 122
    %v1844 = vpop.permute.xlu0 %1843
    %1845 = vrot.lane.b32.xlu0 %v1775, 122
    %v1846 = vpop.permute.xlu0 %1845
    %1847 = vrot.lane.b32.xlu0 %v1776, 122
    %v1848 = vpop.permute.xlu0 %1847
    %1849 = vrot.lane.b32.xlu0 %v1777, 122
    %v1850 = vpop.permute.xlu0 %1849
    %1851 = vrot.lane.b32.xlu0 %v1778, 122
    %v1852 = vpop.permute.xlu0 %1851
    %1853 = vrot.lane.b32.xlu0 %v1779, 122
    %v1854 = vpop.permute.xlu0 %1853
    %1855 = vrot.lane.b32.xlu0 %v1780, 122
    %v1856 = vpop.permute.xlu0 %1855
    %1857 = vrot.lane.b32.xlu0 %v1781, 122
    %v1858 = vpop.permute.xlu0 %1857
    %1859 = vrot.lane.b32.xlu0 %v1782, 122
    %v1860 = vpop.permute.xlu0 %1859
    %1861 = vrot.lane.b32.xlu0 %v1783, 122
    %v1862 = vpop.permute.xlu0 %1861
    %1863 = vrot.lane.b32.xlu0 %v1784, 122
    %v1864 = vpop.permute.xlu0 %1863
    %1881 = vmatprep.subr.mxu0 0.0
    %1882 = vmatpush1.msra.mxu0 %v1834
    %1883 = vmatprep.subr.mxu0 0.0
    %1884 = vmatpush1.msra.mxu0 %v1836
    %1885 = vmatprep.subr.mxu0 0.0
    %1886 = vmatpush1.msra.mxu0 %v1838
    %1887 = vmatprep.subr.mxu0 0.0
    %1888 = vmatpush1.msra.mxu0 %v1840
    %1889 = vmatprep.subr.mxu0 0.0
    %1890 = vmatpush1.msra.mxu0 %v1842
    %1891 = vmatprep.subr.mxu0 0.0
    %1892 = vmatpush1.msra.mxu0 %v1844
    %1893 = vmatprep.subr.mxu0 0.0
    %1894 = vmatpush1.msra.mxu0 %v1846
    %1895 = vmatprep.subr.mxu0 0.0
    %1896 = vmatpush1.msra.mxu0 %v1848
    %1897 = vmatprep.subr.mxu0 0.0
    %1898 = vmatpush1.msra.mxu0 %v1850
    %1899 = vmatprep.subr.mxu0 0.0
    %1900 = vmatpush1.msra.mxu0 %v1852
    %1901 = vmatprep.subr.mxu0 0.0
    %1902 = vmatpush1.msra.mxu0 %v1854
    %1903 = vmatprep.subr.mxu0 0.0
    %1904 = vmatpush1.msra.mxu0 %v1856
    %1905 = vmatprep.subr.mxu0 0.0
    %1906 = vmatpush1.msra.mxu0 %v1858
    %1907 = vmatprep.subr.mxu0 0.0
    %1908 = vmatpush1.msra.mxu0 %v1860
    %1909 = vmatprep.subr.mxu0 0.0
    %1910 = vmatpush1.msra.mxu0 %v1862
    %1911 = vmatprep.subr.mxu0 0.0
    %1912 = vmatpush1.msra.mxu0 %v1864
    %1913 = vmatprep.subr.mxu0 0.0
    %1914 = vmatpush1.msra.mxu0 0.0
    %1915 = vmatprep.subr.mxu0 0.0
    %1916 = vmatpush1.msra.mxu0 0.0
    %1917 = vmatprep.subr.mxu0 0.0
    %1918 = vmatpush1.msra.mxu0 0.0
    %1919 = vmatprep.subr.mxu0 0.0
    %1920 = vmatpush1.msra.mxu0 0.0
    %1921 = vmatprep.subr.mxu0 0.0
    %1922 = vmatpush1.msra.mxu0 0.0
    %1923 = vmatprep.subr.mxu0 0.0
    %1924 = vmatpush1.msra.mxu0 0.0
    %1925 = vmatprep.subr.mxu0 0.0
    %1926 = vmatpush1.msra.mxu0 0.0
    %1927 = vmatprep.subr.mxu0 0.0
    %1928 = vmatpush1.msra.mxu0 0.0
    %1929 = vmatprep.subr.mxu0 0.0
    %1930 = vmatpush1.msra.mxu0 0.0
    %1931 = vmatprep.subr.mxu0 0.0
    %1932 = vmatpush1.msra.mxu0 0.0
    %1933 = vmatprep.subr.mxu0 0.0
    %1934 = vmatpush1.msra.mxu0 0.0
    %1935 = vmatprep.subr.mxu0 0.0
    %1936 = vmatpush1.msra.mxu0 0.0
    %1937 = vmatprep.subr.mxu0 0.0
    %1938 = vmatpush1.msra.mxu0 0.0
    %1939 = vmatprep.subr.mxu0 0.0
    %1940 = vmatpush1.msra.mxu0 0.0
    %1941 = vmatprep.subr.mxu0 0.0
    %1942 = vmatpush1.msra.mxu0 0.0
    %1943 = vmatprep.subr.mxu0 0.0
    %1944 = vmatpush1.msra.mxu0 0.0
    %1945 = vmatprep.mubr.f32.mxu0 0.0
    %1946 = vmatmul.mubr.f32.gmra.mrb[0].mxu0 %v1813
    %v1947 = vpop.f32.mrb[0].mxu0
    %v1948 = vadd.f32 0.0, %v1947
    %v1949 = vpop.f32.mrb[0].mxu0
    %1950 = vmatprep.mubr.f32.mxu0 0.0
    %1951 = vmatmul.mubr.f32.gmra.mrb[0].mxu0 %v1814
    %v1952 = vpop.f32.mrb[0].mxu0
    %v1953 = vadd.f32 0.0, %v1952
    %v1954 = vpop.f32.mrb[0].mxu0
    %1955 = vmatprep.mubr.f32.mxu0 0.0
    %1956 = vmatmul.mubr.f32.gmra.mrb[0].mxu0 %v1815
    %v1957 = vpop.f32.mrb[0].mxu0
    %v1958 = vadd.f32 0.0, %v1957
    %v1959 = vpop.f32.mrb[0].mxu0
    %1960 = vmatprep.mubr.f32.mxu0 0.0
    %1961 = vmatmul.mubr.f32.gmra.mrb[0].mxu0 %v1816
    %v1962 = vpop.f32.mrb[0].mxu0
    %v1963 = vadd.f32 0.0, %v1962
    %v1964 = vpop.f32.mrb[0].mxu0
    %1965 = vdwg.mxu0
    %s1966 = sld [smem:[#allocation2 + $0x180]]
    %1971 = vrot.lane.b32.xlu0 %v1765, 123
    %v1972 = vpop.permute.xlu0 %1971
    %1973 = vrot.lane.b32.xlu0 %v1766, 123
    %v1974 = vpop.permute.xlu0 %1973
    %1975 = vrot.lane.b32.xlu0 %v1767, 123
    %v1976 = vpop.permute.xlu0 %1975
    %1977 = vrot.lane.b32.xlu0 %v1768, 123
    %v1978 = vpop.permute.xlu0 %1977
    %v1983 = vmul.f32 %v1948, %v1972
    %v1984 = vmul.f32 %v1953, %v1974
    %v1985 = vmul.f32 %v1958, %v1976
    %v1986 = vmul.f32 %v1963, %v1978
    %1991 = vrot.lane.b32.xlu0 %v1983, 127
    %v1992 = vpop.permute.xlu0 %1991
    %1993 = vrot.lane.b32.xlu0 %v1984, 127
    %v1994 = vpop.permute.xlu0 %1993
    %1995 = vrot.lane.b32.xlu0 %v1985, 127
    %v1996 = vpop.permute.xlu0 %1995
    %1997 = vrot.lane.b32.xlu0 %v1986, 127
    %v1998 = vpop.permute.xlu0 %1997
    %v2003 = vsel %vm431, %v1992, 0.0
    %v2004 = vsel %vm431, %v1994, 0.0
    %v2005 = vadd.f32 %v2003, %v2004
    %v2006 = vsel %vm431, %v1996, 0.0
    %v2007 = vadd.f32 %v2005, %v2006
    %v2008 = vsel %vm431, %v1998, 0.0
    %v2009 = vadd.f32 %v2007, %v2008
    %2010 = vadd.xlane.f32.xlu0 %v2009
    %v2011 = vpop.xlane.xlu0 %2010
    %v2012 = vrot.slane %v2011, 4
    %v2013 = vadd.f32 %v2011, %v2012
    %v2014 = vrot.slane %v2013, 2
    %v2015 = vadd.f32 %v2013, %v2014
    %v2016 = vrot.slane %v2015, 1
    %v2017 = vadd.f32 %v2015, %v2016
    %s2018 = vtos %v2017
    %s2019 = sadd.f32 %s1966, %s2018
    %s2020 = scalar_lea.smem [#allocation2], 384
    %2021 = sst [smem:[%s2020]] %s2019
    %v2022 = vrot.slane %v256, 4
    %v2023 = vsel %vm978, %v977, %v2022
    %v2024 = vsub.f32 %v251, %v981
    %v2025 = vsub.f32 %v252, %v980
    %v2026 = vsub.f32 %v253, %v979
    %v2027 = vsub.f32 %v254, %v2023
    %v2028 = vand.u32 2147483647, %v2024
    %v2029 = vand.u32 2147483647, %v2025
    %v2030 = vand.u32 2147483647, %v2026
    %v2031 = vand.u32 2147483647, %v2027
    %v2032 = vrot.slane %v250, 4
    %v2033 = vsel %vm978, %v995, %v2032
    %v2034 = vmul.f32 %v245, %v998
    %v2035 = vmul.f32 %v246, %v997
    %v2036 = vmul.f32 %v247, %v996
    %v2037 = vmul.f32 %v248, %v2033
    %v2038 = vmul.f32 %v2028, %v2034
    %v2039 = vmul.f32 %v2029, %v2035
    %v2040 = vmul.f32 %v2030, %v2036
    %v2041 = vmul.f32 %v2031, %v2037
    %2042 = vmatprep.subr.mxu0 0.0
    %2043 = vmatpush1.msra.mxu0 %v1834
    %2044 = vmatprep.subr.mxu0 0.0
    %2045 = vmatpush1.msra.mxu0 %v1836
    %2046 = vmatprep.subr.mxu0 0.0
    %2047 = vmatpush1.msra.mxu0 %v1838
    %2048 = vmatprep.subr.mxu0 0.0
    %2049 = vmatpush1.msra.mxu0 %v1840
    %2050 = vmatprep.subr.mxu0 0.0
    %2051 = vmatpush1.msra.mxu0 %v1842
    %2052 = vmatprep.subr.mxu0 0.0
    %2053 = vmatpush1.msra.mxu0 %v1844
    %2054 = vmatprep.subr.mxu0 0.0
    %2055 = vmatpush1.msra.mxu0 %v1846
    %2056 = vmatprep.subr.mxu0 0.0
    %2057 = vmatpush1.msra.mxu0 %v1848
    %2058 = vmatprep.subr.mxu0 0.0
    %2059 = vmatpush1.msra.mxu0 %v1850
    %2060 = vmatprep.subr.mxu0 0.0
    %2061 = vmatpush1.msra.mxu0 %v1852
    %2062 = vmatprep.subr.mxu0 0.0
    %2063 = vmatpush1.msra.mxu0 %v1854
    %2064 = vmatprep.subr.mxu0 0.0
    %2065 = vmatpush1.msra.mxu0 %v1856
    %2066 = vmatprep.subr.mxu0 0.0
    %2067 = vmatpush1.msra.mxu0 %v1858
    %2068 = vmatprep.subr.mxu0 0.0
    %2069 = vmatpush1.msra.mxu0 %v1860
    %2070 = vmatprep.subr.mxu0 0.0
    %2071 = vmatpush1.msra.mxu0 %v1862
    %2072 = vmatprep.subr.mxu0 0.0
    %2073 = vmatpush1.msra.mxu0 %v1864
    %2074 = vmatprep.subr.mxu0 0.0
    %2075 = vmatpush1.msra.mxu0 0.0
    %2076 = vmatprep.subr.mxu0 0.0
    %2077 = vmatpush1.msra.mxu0 0.0
    %2078 = vmatprep.subr.mxu0 0.0
    %2079 = vmatpush1.msra.mxu0 0.0
    %2080 = vmatprep.subr.mxu0 0.0
    %2081 = vmatpush1.msra.mxu0 0.0
    %2082 = vmatprep.subr.mxu0 0.0
    %2083 = vmatpush1.msra.mxu0 0.0
    %2084 = vmatprep.subr.mxu0 0.0
    %2085 = vmatpush1.msra.mxu0 0.0
    %2086 = vmatprep.subr.mxu0 0.0
    %2087 = vmatpush1.msra.mxu0 0.0
    %2088 = vmatprep.subr.mxu0 0.0
    %2089 = vmatpush1.msra.mxu0 0.0
    %2090 = vmatprep.subr.mxu0 0.0
    %2091 = vmatpush1.msra.mxu0 0.0
    %2092 = vmatprep.subr.mxu0 0.0
    %2093 = vmatpush1.msra.mxu0 0.0
    %2094 = vmatprep.subr.mxu0 0.0
    %2095 = vmatpush1.msra.mxu0 0.0
    %2096 = vmatprep.subr.mxu0 0.0
    %2097 = vmatpush1.msra.mxu0 0.0
    %2098 = vmatprep.subr.mxu0 0.0
    %2099 = vmatpush1.msra.mxu0 0.0
    %2100 = vmatprep.subr.mxu0 0.0
    %2101 = vmatpush1.msra.mxu0 0.0
    %2102 = vmatprep.subr.mxu0 0.0
    %2103 = vmatpush1.msra.mxu0 0.0
    %2104 = vmatprep.subr.mxu0 0.0
    %2105 = vmatpush1.msra.mxu0 0.0
    %2106 = vmatprep.mubr.f32.mxu0 0.0
    %2107 = vmatmul.mubr.f32.gmra.mrb[0].mxu0 %v2038
    %v2108 = vpop.f32.mrb[0].mxu0
    %v2109 = vadd.f32 0.0, %v2108
    %v2110 = vpop.f32.mrb[0].mxu0
    %2111 = vmatprep.mubr.f32.mxu0 0.0
    %2112 = vmatmul.mubr.f32.gmra.mrb[0].mxu0 %v2039
    %v2113 = vpop.f32.mrb[0].mxu0
    %v2114 = vadd.f32 0.0, %v2113
    %v2115 = vpop.f32.mrb[0].mxu0
    %2116 = vmatprep.mubr.f32.mxu0 0.0
    %2117 = vmatmul.mubr.f32.gmra.mrb[0].mxu0 %v2040
    %v2118 = vpop.f32.mrb[0].mxu0
    %v2119 = vadd.f32 0.0, %v2118
    %v2120 = vpop.f32.mrb[0].mxu0
    %2121 = vmatprep.mubr.f32.mxu0 0.0
    %2122 = vmatmul.mubr.f32.gmra.mrb[0].mxu0 %v2041
    %v2123 = vpop.f32.mrb[0].mxu0
    %v2124 = vadd.f32 0.0, %v2123
    %v2125 = vpop.f32.mrb[0].mxu0
    %2126 = vdwg.mxu0
    %s2127 = sld [smem:[#allocation2 + $0x181]]
    %2128 = vrot.lane.b32.xlu0 %v1765, 121
    %v2129 = vpop.permute.xlu0 %2128
    %2130 = vrot.lane.b32.xlu0 %v1766, 121
    %v2131 = vpop.permute.xlu0 %2130
    %2132 = vrot.lane.b32.xlu0 %v1767, 121
    %v2133 = vpop.permute.xlu0 %2132
    %2134 = vrot.lane.b32.xlu0 %v1768, 121
    %v2135 = vpop.permute.xlu0 %2134
    %v2140 = vmul.f32 %v2109, %v2129
    %v2141 = vmul.f32 %v2114, %v2131
    %v2142 = vmul.f32 %v2119, %v2133
    %v2143 = vmul.f32 %v2124, %v2135
    %v2144 = vsel %vm431, %v2140, 0.0
    %v2145 = vsel %vm431, %v2141, 0.0
    %v2146 = vadd.f32 %v2144, %v2145
    %v2147 = vsel %vm431, %v2142, 0.0
    %v2148 = vadd.f32 %v2146, %v2147
    %v2149 = vsel %vm431, %v2143, 0.0
    %v2150 = vadd.f32 %v2148, %v2149
    %2151 = vadd.xlane.f32.xlu0 %v2150
    %v2152 = vpop.xlane.xlu0 %2151
    %v2153 = vrot.slane %v2152, 4
    %v2154 = vadd.f32 %v2152, %v2153
    %v2155 = vrot.slane %v2154, 2
    %v2156 = vadd.f32 %v2154, %v2155
    %v2157 = vrot.slane %v2156, 1
    %v2158 = vadd.f32 %v2156, %v2157
    %s2159 = vtos %v2158
    %s2160 = sadd.f32 %s2127, %s2159
    %s2161 = scalar_lea.smem [#allocation2], 385
    %2162 = sst [smem:[%s2161]] %s2160
    %2163 = vmatprep.subr.mxu0 0.0
    %2164 = vmatpush1.msra.mxu0 %v1834
    %2165 = vmatprep.subr.mxu0 0.0
    %2166 = vmatpush1.msra.mxu0 %v1836
    %2167 = vmatprep.subr.mxu0 0.0
    %2168 = vmatpush1.msra.mxu0 %v1838
    %2169 = vmatprep.subr.mxu0 0.0
    %2170 = vmatpush1.msra.mxu0 %v1840
    %2171 = vmatprep.subr.mxu0 0.0
    %2172 = vmatpush1.msra.mxu0 %v1842
    %2173 = vmatprep.subr.mxu0 0.0
    %2174 = vmatpush1.msra.mxu0 %v1844
    %2175 = vmatprep.subr.mxu0 0.0
    %2176 = vmatpush1.msra.mxu0 %v1846
    %2177 = vmatprep.subr.mxu0 0.0
    %2178 = vmatpush1.msra.mxu0 %v1848
    %2179 = vmatprep.subr.mxu0 0.0
    %2180 = vmatpush1.msra.mxu0 %v1850
    %2181 = vmatprep.subr.mxu0 0.0
    %2182 = vmatpush1.msra.mxu0 %v1852
    %2183 = vmatprep.subr.mxu0 0.0
    %2184 = vmatpush1.msra.mxu0 %v1854
    %2185 = vmatprep.subr.mxu0 0.0
    %2186 = vmatpush1.msra.mxu0 %v1856
    %2187 = vmatprep.subr.mxu0 0.0
    %2188 = vmatpush1.msra.mxu0 %v1858
    %2189 = vmatprep.subr.mxu0 0.0
    %2190 = vmatpush1.msra.mxu0 %v1860
    %2191 = vmatprep.subr.mxu0 0.0
    %2192 = vmatpush1.msra.mxu0 %v1862
    %2193 = vmatprep.subr.mxu0 0.0
    %2194 = vmatpush1.msra.mxu0 %v1864
    %2195 = vmatprep.subr.mxu0 0.0
    %2196 = vmatpush1.msra.mxu0 0.0
    %2197 = vmatprep.subr.mxu0 0.0
    %2198 = vmatpush1.msra.mxu0 0.0
    %2199 = vmatprep.subr.mxu0 0.0
    %2200 = vmatpush1.msra.mxu0 0.0
    %2201 = vmatprep.subr.mxu0 0.0
    %2202 = vmatpush1.msra.mxu0 0.0
    %2203 = vmatprep.subr.mxu0 0.0
    %2204 = vmatpush1.msra.mxu0 0.0
    %2205 = vmatprep.subr.mxu0 0.0
    %2206 = vmatpush1.msra.mxu0 0.0
    %2207 = vmatprep.subr.mxu0 0.0
    %2208 = vmatpush1.msra.mxu0 0.0
    %2209 = vmatprep.subr.mxu0 0.0
    %2210 = vmatpush1.msra.mxu0 0.0
    %2211 = vmatprep.subr.mxu0 0.0
    %2212 = vmatpush1.msra.mxu0 0.0
    %2213 = vmatprep.subr.mxu0 0.0
    %2214 = vmatpush1.msra.mxu0 0.0
    %2215 = vmatprep.subr.mxu0 0.0
    %2216 = vmatpush1.msra.mxu0 0.0
    %2217 = vmatprep.subr.mxu0 0.0
    %2218 = vmatpush1.msra.mxu0 0.0
    %2219 = vmatprep.subr.mxu0 0.0
    %2220 = vmatpush1.msra.mxu0 0.0
    %2221 = vmatprep.subr.mxu0 0.0
    %2222 = vmatpush1.msra.mxu0 0.0
    %2223 = vmatprep.subr.mxu0 0.0
    %2224 = vmatpush1.msra.mxu0 0.0
    %2225 = vmatprep.subr.mxu0 0.0
    %2226 = vmatpush1.msra.mxu0 0.0
    %2227 = vmatprep.mubr.f32.mxu0 0.0
    %2228 = vmatmul.mubr.f32.gmra.mrb[0].mxu0 %v245
    %v2229 = vpop.f32.mrb[0].mxu0
    %v2230 = vadd.f32 0.0, %v2229
    %v2231 = vpop.f32.mrb[0].mxu0
    %2232 = vmatprep.mubr.f32.mxu0 0.0
    %2233 = vmatmul.mubr.f32.gmra.mrb[0].mxu0 %v246
    %v2234 = vpop.f32.mrb[0].mxu0
    %v2235 = vadd.f32 0.0, %v2234
    %v2236 = vpop.f32.mrb[0].mxu0
    %2237 = vmatprep.mubr.f32.mxu0 0.0
    %2238 = vmatmul.mubr.f32.gmra.mrb[0].mxu0 %v247
    %v2239 = vpop.f32.mrb[0].mxu0
    %v2240 = vadd.f32 0.0, %v2239
    %v2241 = vpop.f32.mrb[0].mxu0
    %2242 = vmatprep.mubr.f32.mxu0 0.0
    %2243 = vmatmul.mubr.f32.gmra.mrb[0].mxu0 %v248
    %v2244 = vpop.f32.mrb[0].mxu0
    %v2245 = vadd.f32 0.0, %v2244
    %v2246 = vpop.f32.mrb[0].mxu0
    %2247 = vdwg.mxu0
    %s2248 = sld [smem:[#allocation2 + $0x182]]
    %2249 = vrot.lane.b32.xlu0 %v1765, 122
    %v2250 = vpop.permute.xlu0 %2249
    %2251 = vrot.lane.b32.xlu0 %v1766, 122
    %v2252 = vpop.permute.xlu0 %2251
    %2253 = vrot.lane.b32.xlu0 %v1767, 122
    %v2254 = vpop.permute.xlu0 %2253
    %2255 = vrot.lane.b32.xlu0 %v1768, 122
    %v2256 = vpop.permute.xlu0 %2255
    %v2261 = vmul.f32 %v2230, %v2250
    %v2262 = vmul.f32 %v2235, %v2252
    %v2263 = vmul.f32 %v2240, %v2254
    %v2264 = vmul.f32 %v2245, %v2256
    %v2265 = vsel %vm431, %v2261, 0.0
    %v2266 = vsel %vm431, %v2262, 0.0
    %v2267 = vadd.f32 %v2265, %v2266
    %v2268 = vsel %vm431, %v2263, 0.0
    %v2269 = vadd.f32 %v2267, %v2268
    %v2270 = vsel %vm431, %v2264, 0.0
    %v2271 = vadd.f32 %v2269, %v2270
    %2272 = vadd.xlane.f32.xlu0 %v2271
    %v2273 = vpop.xlane.xlu0 %2272
    %v2274 = vrot.slane %v2273, 4
    %v2275 = vadd.f32 %v2273, %v2274
    %v2276 = vrot.slane %v2275, 2
    %v2277 = vadd.f32 %v2275, %v2276
    %v2278 = vrot.slane %v2277, 1
    %v2279 = vadd.f32 %v2277, %v2278
    %s2280 = vtos %v2279
    %s2281 = sadd.f32 %s2248, %s2280
    %s2282 = scalar_lea.smem [#allocation2], 386
    %2283 = sst [smem:[%s2282]] %s2281
    // Predicated region
    $region30: #{tpu_custom_call.1} parent=1 // pred_check
      _
    $region31: #{tpu_custom_call.1} parent=1 // pred_check_branch
      %2285 = sbr.rel (0) target = $region33
    $region32: #{tpu_custom_call.1} parent=1 // pred_region
      %s2287 = ssub.s32 64, 64
      %2288 = vsyncadd [#allocation3], %s2287
      %2291 = dma.smem_to_hbm [#allocation2], 64, %s6, [#allocation3]
    $region33: #{tpu_custom_call.1} parent=1 // pred_fallthru
      _
    // Predicated region
    $region34: #{tpu_custom_call.1} parent=1 // pred_check
      _
    $region35: #{tpu_custom_call.1} parent=1 // pred_check_branch
      %2293 = sbr.rel (0) target = $region37
    $region36: #{tpu_custom_call.1} parent=1 // pred_region
      %2294 = dma.done [#allocation3], 64
    $region37: #{tpu_custom_call.1} parent=1 // pred_fallthru
      _
    %2295 = sfence
    %2296 = vsyncpa [#allocation3], 1

</llo_original>
